<compile_context>
chip_gen: v5e
topology: v5e:2x2
jax: 0.10.0
libtpu: 0.0.40
codegen_flags: <defaults>
</compile_context>

<pallas_src>
import numpy as np
import jax
import jax.numpy as jnp
from jax import lax
from jax.experimental import pallas as pl
from jax.experimental.pallas import tpu as pltpu


def _round_up(x, m):
    return (x + m - 1) // m * m


def _rnn_classifier_kernel(x_ref, len_ref, wih0_ref, wihr_ref, whh_ref,
                           b_ref, wfc_ref, bfc_ref, out_ref, buf):
    """One batch tile of the stacked tanh RNN + masked time-mean + Linear head.

    x_ref:    (T, bB, E)   bf16 time-major embeddings (zero rows for pad tokens)
    len_ref:  (bB, 1)      i32 valid length per row (0 for batch-padding rows)
    wih0_ref: (E, Hp)      bf16 layer-0 input weights (pre-transposed, H padded)
    wihr_ref: (L-1, Hp, Hp) bf16 layer>0 input weights
    whh_ref:  (L, Hp, Hp)  bf16 recurrent weights
    b_ref:    (L, Hp)      f32 folded bias b_ih + b_hh
    wfc_ref:  (Hp, Cp) bf16   bfc_ref: (1, Cp) f32   out_ref: (bB, Cp) f32
    buf:      (T, bB, Hp)  bf16 VMEM scratch (projections, then layer outputs)
    """
    T, bB, E = x_ref.shape
    L, Hp, _ = whh_ref.shape

    lens = len_ref[...]                                  # (bB, 1) int32
    unroll = True if T <= 32 else 4
    # Cap the live projection temporary to ~512 rows per dot+store.
    chunk_t = max(1, min(T, 512 // bB))

    for l in range(L):                                   # static unroll: layers
        w_ih = wih0_ref[...] if l == 0 else wihr_ref[l - 1]
        bias = b_ref[l:l + 1, :]                         # (1, Hp) f32, folded

        # Batched input projection for all timesteps, computed in time chunks
        # and written in place into `buf` (each [t,b,:] depends only on the
        # same [t,b,:] of the previous layer's output, so in-place is safe).
        t0 = 0
        while t0 < T:
            tc = min(chunk_t, T - t0)
            if l == 0:
                xin = x_ref[pl.ds(t0, tc)].reshape(tc * bB, E)
            else:
                xin = buf[pl.ds(t0, tc)].reshape(tc * bB, Hp)
            p = jnp.dot(xin, w_ih, preferred_element_type=jnp.float32) + bias
            buf[pl.ds(t0, tc)] = p.astype(jnp.bfloat16).reshape(tc, bB, Hp)
            t0 += tc

        w_hh = whh_ref[l]                                # (Hp, Hp) bf16
        h0 = jnp.zeros((bB, Hp), jnp.bfloat16)           # bf16 carry for MXU

        if l < L - 1:
            # Hidden state stays in the carry (vregs); the layer output
            # overwrites the now-dead projection row in the single buffer.
            def step(t, h, w_hh=w_hh):
                pre = buf[t].astype(jnp.float32) + jnp.dot(
                    h, w_hh, preferred_element_type=jnp.float32)
                h_new = jnp.tanh(pre).astype(jnp.bfloat16)
                buf[t] = h_new
                return h_new

            lax.fori_loop(0, T, step, h0, unroll=unroll)
        else:
            # Last layer: fuse pack/pad masking + time-sum into the recurrence.
            acc0 = jnp.zeros((bB, Hp), jnp.float32)

            def step(t, carry, w_hh=w_hh):
                h, acc = carry
                pre = buf[t].astype(jnp.float32) + jnp.dot(
                    h, w_hh, preferred_element_type=jnp.float32)
                h_f32 = jnp.tanh(pre)
                mask_t = (t < lens).astype(jnp.float32)  # (bB, 1)
                return h_f32.astype(jnp.bfloat16), acc + h_f32 * mask_t

            _, acc = lax.fori_loop(0, T, step, (h0, acc0), unroll=unroll)
            # torch: Linear at every timestep, mean over the FULL padded T
            #        == (sum_t masked h_t / T) @ W_fc + b_fc
            mean_h = (acc * (1.0 / T)).astype(jnp.bfloat16)
            out_ref[...] = (jnp.dot(mean_h, wfc_ref[...],
                                    preferred_element_type=jnp.float32)
                            + bfc_ref[...])


def _weight_spec(shape, index_map):
    """Grid-invariant weights: single-buffered to avoid duplicating them in VMEM."""
    if hasattr(pl, "Buffered"):
        try:
            return pl.BlockSpec(shape, index_map, pipeline_mode=pl.Buffered(1))
        except TypeError:
            pass
    return pl.BlockSpec(shape, index_map)


def _vmem_bytes_estimate(T, bB, E, Hp, Cp, L):
    bf, f4 = 2, 4
    scratch = T * bB * Hp * bf                        # merged layer buffer (x1)
    tiled_in = 2 * (T * bB * E * bf + bB * f4)        # x + lengths, double-buffered
    weights = (E * Hp + (2 * L - 1) * Hp * Hp + Hp * Cp) * bf   # Buffered(1)
    biases = (L * Hp + Cp) * f4
    out = 2 * bB * Cp * f4                            # double-buffered out block
    return scratch + tiled_in + weights + biases + out


def init_params(key, vocab_size, embedding_size, hidden_size, num_layers,
                num_classes):
    E, H, L, C = embedding_size, hidden_size, num_layers, num_classes
    bound = 1.0 / np.sqrt(H)
    keys = list(jax.random.split(key, 4 + 4 * L))
    ki = iter(keys)

    emb = jax.random.normal(next(ki), (vocab_size, E), jnp.float32) * 0.1
    emb = emb.at[0].set(0.0)                     # padding_idx=0 row is zero

    wih, whh, bih, bhh = [], [], [], []
    for l in range(L):
        in_dim = E if l == 0 else H
        wih.append(jax.random.uniform(next(ki), (H, in_dim), jnp.float32,
                                      -bound, bound))
        whh.append(jax.random.uniform(next(ki), (H, H), jnp.float32,
                                      -bound, bound))
        kb = jax.random.split(next(ki), 2)
        bih.append(jax.random.uniform(kb[0], (H,), jnp.float32, -bound, bound))
        bhh.append(jax.random.uniform(kb[1], (H,), jnp.float32, -bound, bound))

    wfc = jax.random.uniform(next(ki), (C, H), jnp.float32, -bound, bound)
    bfc = jax.random.uniform(next(ki), (C,), jnp.float32, -bound, bound)

    # Pre-transpose all matmul weights so the kernel does plain x @ W.
    params = (
        emb,
        wih[0].T,                                      # (E, H)
        jnp.stack([w.T for w in wih[1:]]),             # (L-1, H, H)
        jnp.stack([w.T for w in whh]),                 # (L, H, H)
        jnp.stack(bih),                                # (L, H)
        jnp.stack(bhh),                                # (L, H)
        wfc.T,                                         # (H, C)
        bfc[None, :],                                  # (1, C)
    )
    return params


@jax.jit
def word_classifier_forward(inputs, params):
    emb_table, wih0_t, wihr_t, whh_t, bih_s, bhh_s, wfc_t, bfc = params
    B, T = inputs.shape
    E = emb_table.shape[1]
    L, H, _ = whh_t.shape
    C = wfc_t.shape[1]
    assert L >= 2, "L == 1 would create a zero-sized (0,Hp,Hp) wihr block"

    # pack_padded_sequence semantics: length = index of first 0 token
    # (padding is strictly trailing; token 0 never appears mid-sequence).
    # All-zero rows (length 0) yield b_fc; torch would reject such inputs.
    is_pad = inputs == 0
    lengths = jnp.where(jnp.any(is_pad, axis=1),
                        jnp.argmax(is_pad, axis=1), T).astype(jnp.int32)

    # Gather embeddings directly time-major — no extra (B,T,E) transpose pass.
    x_tm = emb_table[inputs.T].astype(jnp.bfloat16)        # (T, B, E) bf16

    # MXU / vreg friendly padding: H,C -> multiple of 128 (lane dim), batch
    # tile bB a multiple of 8 (sublane dim).  Zero padding is exact (tanh(0)=0).
    Hp = _round_up(H, 128)
    Cp = _round_up(C, 128)
    Bp8 = _round_up(B, 8)

    # Batch tile: big for MXU fill, but >=2 grid steps when the batch allows
    # (v7x has 2 TensorCores), then shrink until the VMEM estimate fits.
    bB = min(256, Bp8)
    if Bp8 >= 16 and Bp8 // bB < 2:
        bB = _round_up((Bp8 + 1) // 2, 8)
    try:
        vmem_cap = int(pltpu.get_tpu_info().vmem_capacity_bytes)
    except Exception:
        vmem_cap = 64 * 1024 * 1024                        # v7x-safe fallback
    safe_cap = int(0.8 * vmem_cap)                         # headroom for Mosaic
    while bB > 8 and _vmem_bytes_estimate(T, bB, E, Hp, Cp, L) > safe_cap:
        bB -= 8
    # TODO(synk): if even bB == 8 does not fit (very long T), split T across an
    # "arbitrary" grid axis with a carried hidden state instead of shrinking bB.

    Bp = _round_up(B, bB)
    dH = Hp - H
    dC = Cp - C

    x_p = jnp.pad(x_tm, ((0, 0), (0, Bp - B), (0, 0)))     # (T, Bp, E) bf16
    len_p = jnp.pad(lengths, (0, Bp - B)).reshape(Bp, 1)   # (Bp, 1) i32
    wih0_p = jnp.pad(wih0_t, ((0, 0), (0, dH))).astype(jnp.bfloat16)
    wihr_p = jnp.pad(wihr_t, ((0, 0), (0, dH), (0, dH))).astype(jnp.bfloat16)
    whh_p = jnp.pad(whh_t, ((0, 0), (0, dH), (0, dH))).astype(jnp.bfloat16)
    b_p = jnp.pad(bih_s + bhh_s, ((0, 0), (0, dH)))        # (L, Hp) f32 folded
    wfc_p = jnp.pad(wfc_t, ((0, dH), (0, dC))).astype(jnp.bfloat16)  # (Hp, Cp)
    bfc_p = jnp.pad(bfc, ((0, 0), (0, dC)))                # (1, Cp) f32

    grid = (Bp // bB,)

    est = _vmem_bytes_estimate(T, bB, E, Hp, Cp, L)
    vmem_limit = int(min(max(int(1.3 * est), 32 * 1024 * 1024), safe_cap))

    out = pl.pallas_call(
        _rnn_classifier_kernel,
        out_shape=jax.ShapeDtypeStruct((Bp, Cp), jnp.float32),
        grid=grid,
        in_specs=[
            pl.BlockSpec((T, bB, E), lambda i: (0, i, 0)),        # x (batch tile)
            pl.BlockSpec((bB, 1), lambda i: (i, 0)),              # lengths
            _weight_spec((E, Hp), lambda i: (0, 0)),              # W_ih layer 0
            _weight_spec((L - 1, Hp, Hp), lambda i: (0, 0, 0)),   # W_ih layers>0
            _weight_spec((L, Hp, Hp), lambda i: (0, 0, 0)),       # W_hh
            _weight_spec((L, Hp), lambda i: (0, 0)),              # folded bias
            _weight_spec((Hp, Cp), lambda i: (0, 0)),             # W_fc
            _weight_spec((1, Cp), lambda i: (0, 0)),              # b_fc
        ],
        out_specs=pl.BlockSpec((bB, Cp), lambda i: (i, 0)),
        scratch_shapes=[
            pltpu.VMEM((T, bB, Hp), jnp.bfloat16),   # single merged layer buffer
        ],
        compiler_params=pltpu.CompilerParams(
            dimension_semantics=("parallel",),
            vmem_limit_bytes=vmem_limit),
    )(x_p, len_p, wih0_p, wihr_p, whh_p, b_p, wfc_p, bfc_p)

    return out[:B, :C]


def reference_forward(inputs, params):
    """Pure-JAX f32 reference replicating the PyTorch forward (eval mode)."""
    emb_table, wih0_t, wihr_t, whh_t, bih_s, bhh_s, wfc_t, bfc = params
    B, T = inputs.shape
    L, H, _ = whh_t.shape
    emb = emb_table[inputs]
    is_pad = inputs == 0
    lengths = jnp.where(jnp.any(is_pad, axis=1), jnp.argmax(is_pad, axis=1), T)
    mask = (jnp.arange(T)[None, :] < lengths[:, None]).astype(jnp.float32)

    wih_all = [wih0_t] + [wihr_t[i] for i in range(L - 1)]
    x = emb
    for l in range(L):
        xp = jnp.einsum('bti,ih->bth', x, wih_all[l]) + bih_s[l]

        def step(h, xp_t, l=l):
            h_new = jnp.tanh(xp_t + h @ whh_t[l] + bhh_s[l])
            return h_new, h_new

        _, ys = lax.scan(step, jnp.zeros((B, H), jnp.float32),
                         jnp.transpose(xp, (1, 0, 2)))
        x = jnp.transpose(ys, (1, 0, 2))
    x = x * mask[:, :, None]
    # torch: Linear then mean over dim=1  ==  mean then Linear (affine).
    return jnp.mean(x, axis=1) @ wfc_t + bfc


if __name__ == "__main__":
    key = jax.random.PRNGKey(0)
    kp, ki = jax.random.split(key)

    vocab_size, embedding_size, hidden_size, num_layers, num_classes = 16, 32, 32, 4, 4
    B, T = 2, 8

    params = init_params(kp, vocab_size, embedding_size, hidden_size,
                         num_layers, num_classes)

    tokens = jax.random.randint(ki, (B, T), 1, vocab_size, dtype=jnp.int32)
    tokens = tokens.at[1, 5:].set(0)   # row 1 is padded after length 5

    out = word_classifier_forward(tokens, params)
    out = jax.block_until_ready(out)

    ref = reference_forward(tokens, params)
    assert out.shape == (B, num_classes)
    # bf16 storage in the kernel (f32 reference) -> loosened tolerance.
    assert np.allclose(np.asarray(out), np.asarray(ref), atol=2e-2, rtol=2e-2)
    print("KERNEL_OK")
</pallas_src>

<mosaic_0001>
module attributes {stable_mosaic.version = 11 : i64} {
  func.func @_rnn_classifier_kernel(%arg0: i32, %arg1: memref<8x8x32xbf16, #tpu.memory_space<vmem>>, %arg2: memref<8x1xi32, #tpu.memory_space<vmem>>, %arg3: memref<32x128xbf16, #tpu.memory_space<vmem>>, %arg4: memref<3x128x128xbf16, #tpu.memory_space<vmem>>, %arg5: memref<4x128x128xbf16, #tpu.memory_space<vmem>>, %arg6: memref<4x128xf32, #tpu.memory_space<vmem>>, %arg7: memref<128x128xbf16, #tpu.memory_space<vmem>>, %arg8: memref<1x128xf32, #tpu.memory_space<vmem>>, %arg9: memref<8x128xf32, #tpu.memory_space<vmem>>, %arg10: memref<8x8x128xbf16, #tpu.memory_space<vmem>>) attributes {dimension_semantics = [#tpu.dimension_semantics<parallel>], iteration_bounds = array<i64: 1>, scalar_prefetch = 0 : i64, scratch_operands = 1 : i64, tpu.core_type = #tpu.core_type<tc>, window_params = [{transform_indices = @transform_0, window_bounds = array<i64: 8, 8, 32>}, {transform_indices = @transform_1, window_bounds = array<i64: 8, 1>}, {pipeline_mode = #tpu.pipeline_mode<synchronous>, transform_indices = @transform_2, window_bounds = array<i64: 32, 128>}, {pipeline_mode = #tpu.pipeline_mode<synchronous>, transform_indices = @transform_3, window_bounds = array<i64: 3, 128, 128>}, {pipeline_mode = #tpu.pipeline_mode<synchronous>, transform_indices = @transform_4, window_bounds = array<i64: 4, 128, 128>}, {pipeline_mode = #tpu.pipeline_mode<synchronous>, transform_indices = @transform_5, window_bounds = array<i64: 4, 128>}, {pipeline_mode = #tpu.pipeline_mode<synchronous>, transform_indices = @transform_6, window_bounds = array<i64: 128, 128>}, {pipeline_mode = #tpu.pipeline_mode<synchronous>, transform_indices = @transform_7, window_bounds = array<i64: 1, 128>}, {transform_indices = @transform_8, window_bounds = array<i64: 8, 128>}]} {
    %c0 = arith.constant 0 : index
    %c0_0 = arith.constant 0 : index
    %0 = vector.load %arg2[%c0, %c0_0] : memref<8x1xi32, #tpu.memory_space<vmem>>, vector<8x1xi32>
    %c0_1 = arith.constant 0 : index
    %c0_2 = arith.constant 0 : index
    %1 = vector.load %arg3[%c0_1, %c0_2] : memref<32x128xbf16, #tpu.memory_space<vmem>>, vector<32x128xbf16>
    %c0_3 = arith.constant 0 : index
    %c0_4 = arith.constant 0 : index
    %2 = vector.load %arg6[%c0_3, %c0_4] : memref<4x128xf32, #tpu.memory_space<vmem>>, vector<1x128xf32>
    %c0_5 = arith.constant 0 : index
    %c0_6 = arith.constant 0 : index
    %c0_7 = arith.constant 0 : index
    %3 = vector.load %arg1[%c0_5, %c0_6, %c0_7] : memref<8x8x32xbf16, #tpu.memory_space<vmem>>, vector<8x8x32xbf16>
    %4 = vector.shape_cast %3 : vector<8x8x32xbf16> to vector<64x32xbf16>
    %cst = arith.constant dense<0.000000e+00> : vector<64x128xf32>
    %5 = tpu.matmul %4, %1, %cst {dimension_numbers = #tpu.dot_dimension_numbers<[1], [0], [0], [1], [0, 0, 1, 1], [], []>} : vector<64x32xbf16>, vector<32x128xbf16>, vector<64x128xf32> -> vector<64x128xf32>
    %6 = vector.broadcast %2 : vector<1x128xf32> to vector<64x128xf32>
    %7 = arith.addf %5, %6 : vector<64x128xf32>
    %8 = arith.truncf %7 : vector<64x128xf32> to vector<64x128xbf16>
    %9 = vector.shape_cast %8 : vector<64x128xbf16> to vector<8x8x128xbf16>
    %c0_8 = arith.constant 0 : index
    %c0_9 = arith.constant 0 : index
    %c0_10 = arith.constant 0 : index
    %10 = vector.load %arg10[%c0_8, %c0_9, %c0_10] : memref<8x8x128xbf16, #tpu.memory_space<vmem>>, vector<8x8x128xbf16>
    tpu.vector_store %arg10[%c0_8, %c0_9, %c0_10], %9 {strides = array<i32>} : memref<8x8x128xbf16, #tpu.memory_space<vmem>>, vector<8x8x128xbf16>,
    %c0_11 = arith.constant 0 : index
    %c0_12 = arith.constant 0 : index
    %c0_13 = arith.constant 0 : index
    %11 = vector.load %arg5[%c0_11, %c0_12, %c0_13] : memref<4x128x128xbf16, #tpu.memory_space<vmem>>, vector<1x128x128xbf16>
    %12 = vector.shape_cast %11 : vector<1x128x128xbf16> to vector<128x128xbf16>
    %cst_14 = arith.constant 0.000000e+00 : bf16
    %13 = vector.broadcast %cst_14 : bf16 to vector<8x128xbf16>
    %c0_i32 = arith.constant 0 : i32
    %14 = arith.index_cast %c0_i32 : i32 to index
    %c0_15 = arith.constant 0 : index
    %c0_16 = arith.constant 0 : index
    %15 = vector.load %arg10[%14, %c0_15, %c0_16] : memref<8x8x128xbf16, #tpu.memory_space<vmem>>, vector<1x8x128xbf16>
    %16 = vector.shape_cast %15 : vector<1x8x128xbf16> to vector<8x128xbf16>
    %17 = arith.extf %16 : vector<8x128xbf16> to vector<8x128xf32>
    %cst_17 = arith.constant dense<0.000000e+00> : vector<8x128xf32>
    %18 = tpu.matmul %13, %12, %cst_17 {dimension_numbers = #tpu.dot_dimension_numbers<[1], [0], [0], [1], [0, 0, 1, 1], [], []>} : vector<8x128xbf16>, vector<128x128xbf16>, vector<8x128xf32> -> vector<8x128xf32>
    %19 = arith.addf %17, %18 : vector<8x128xf32>
    %20 = math.tanh %19 : vector<8x128xf32>
    %21 = arith.truncf %20 : vector<8x128xf32> to vector<8x128xbf16>
    %22 = arith.index_cast %c0_i32 : i32 to index
    %c0_18 = arith.constant 0 : index
    %c0_19 = arith.constant 0 : index
    %23 = vector.load %arg10[%22, %c0_18, %c0_19] : memref<8x8x128xbf16, #tpu.memory_space<vmem>>, vector<1x8x128xbf16>
    %24 = vector.shape_cast %23 : vector<1x8x128xbf16> to vector<8x128xbf16>
    %25 = vector.shape_cast %21 : vector<8x128xbf16> to vector<1x8x128xbf16>
    tpu.vector_store %arg10[%22, %c0_18, %c0_19], %25 {strides = array<i32>} : memref<8x8x128xbf16, #tpu.memory_space<vmem>>, vector<1x8x128xbf16>,
    %c1_i32 = arith.constant 1 : i32
    %26 = arith.index_cast %c1_i32 : i32 to index
    %c0_20 = arith.constant 0 : index
    %c0_21 = arith.constant 0 : index
    %27 = vector.load %arg10[%26, %c0_20, %c0_21] : memref<8x8x128xbf16, #tpu.memory_space<vmem>>, vector<1x8x128xbf16>
    %28 = vector.shape_cast %27 : vector<1x8x128xbf16> to vector<8x128xbf16>
    %29 = arith.extf %28 : vector<8x128xbf16> to vector<8x128xf32>
    %cst_22 = arith.constant dense<0.000000e+00> : vector<8x128xf32>
    %30 = tpu.matmul %21, %12, %cst_22 {dimension_numbers = #tpu.dot_dimension_numbers<[1], [0], [0], [1], [0, 0, 1, 1], [], []>} : vector<8x128xbf16>, vector<128x128xbf16>, vector<8x128xf32> -> vector<8x128xf32>
    %31 = arith.addf %29, %30 : vector<8x128xf32>
    %32 = math.tanh %31 : vector<8x128xf32>
    %33 = arith.truncf %32 : vector<8x128xf32> to vector<8x128xbf16>
    %34 = arith.index_cast %c1_i32 : i32 to index
    %c0_23 = arith.constant 0 : index
    %c0_24 = arith.constant 0 : index
    %35 = vector.load %arg10[%34, %c0_23, %c0_24] : memref<8x8x128xbf16, #tpu.memory_space<vmem>>, vector<1x8x128xbf16>
    %36 = vector.shape_cast %35 : vector<1x8x128xbf16> to vector<8x128xbf16>
    %37 = vector.shape_cast %33 : vector<8x128xbf16> to vector<1x8x128xbf16>
    tpu.vector_store %arg10[%34, %c0_23, %c0_24], %37 {strides = array<i32>} : memref<8x8x128xbf16, #tpu.memory_space<vmem>>, vector<1x8x128xbf16>,
    %c2_i32 = arith.constant 2 : i32
    %38 = arith.index_cast %c2_i32 : i32 to index
    %c0_25 = arith.constant 0 : index
    %c0_26 = arith.constant 0 : index
    %39 = vector.load %arg10[%38, %c0_25, %c0_26] : memref<8x8x128xbf16, #tpu.memory_space<vmem>>, vector<1x8x128xbf16>
    %40 = vector.shape_cast %39 : vector<1x8x128xbf16> to vector<8x128xbf16>
    %41 = arith.extf %40 : vector<8x128xbf16> to vector<8x128xf32>
    %cst_27 = arith.constant dense<0.000000e+00> : vector<8x128xf32>
    %42 = tpu.matmul %33, %12, %cst_27 {dimension_numbers = #tpu.dot_dimension_numbers<[1], [0], [0], [1], [0, 0, 1, 1], [], []>} : vector<8x128xbf16>, vector<128x128xbf16>, vector<8x128xf32> -> vector<8x128xf32>
    %43 = arith.addf %41, %42 : vector<8x128xf32>
    %44 = math.tanh %43 : vector<8x128xf32>
    %45 = arith.truncf %44 : vector<8x128xf32> to vector<8x128xbf16>
    %46 = arith.index_cast %c2_i32 : i32 to index
    %c0_28 = arith.constant 0 : index
    %c0_29 = arith.constant 0 : index
    %47 = vector.load %arg10[%46, %c0_28, %c0_29] : memref<8x8x128xbf16, #tpu.memory_space<vmem>>, vector<1x8x128xbf16>
    %48 = vector.shape_cast %47 : vector<1x8x128xbf16> to vector<8x128xbf16>
    %49 = vector.shape_cast %45 : vector<8x128xbf16> to vector<1x8x128xbf16>
    tpu.vector_store %arg10[%46, %c0_28, %c0_29], %49 {strides = array<i32>} : memref<8x8x128xbf16, #tpu.memory_space<vmem>>, vector<1x8x128xbf16>,
    %c3_i32 = arith.constant 3 : i32
    %50 = arith.index_cast %c3_i32 : i32 to index
    %c0_30 = arith.constant 0 : index
    %c0_31 = arith.constant 0 : index
    %51 = vector.load %arg10[%50, %c0_30, %c0_31] : memref<8x8x128xbf16, #tpu.memory_space<vmem>>, vector<1x8x128xbf16>
    %52 = vector.shape_cast %51 : vector<1x8x128xbf16> to vector<8x128xbf16>
    %53 = arith.extf %52 : vector<8x128xbf16> to vector<8x128xf32>
    %cst_32 = arith.constant dense<0.000000e+00> : vector<8x128xf32>
    %54 = tpu.matmul %45, %12, %cst_32 {dimension_numbers = #tpu.dot_dimension_numbers<[1], [0], [0], [1], [0, 0, 1, 1], [], []>} : vector<8x128xbf16>, vector<128x128xbf16>, vector<8x128xf32> -> vector<8x128xf32>
    %55 = arith.addf %53, %54 : vector<8x128xf32>
    %56 = math.tanh %55 : vector<8x128xf32>
    %57 = arith.truncf %56 : vector<8x128xf32> to vector<8x128xbf16>
    %58 = arith.index_cast %c3_i32 : i32 to index
    %c0_33 = arith.constant 0 : index
    %c0_34 = arith.constant 0 : index
    %59 = vector.load %arg10[%58, %c0_33, %c0_34] : memref<8x8x128xbf16, #tpu.memory_space<vmem>>, vector<1x8x128xbf16>
    %60 = vector.shape_cast %59 : vector<1x8x128xbf16> to vector<8x128xbf16>
    %61 = vector.shape_cast %57 : vector<8x128xbf16> to vector<1x8x128xbf16>
    tpu.vector_store %arg10[%58, %c0_33, %c0_34], %61 {strides = array<i32>} : memref<8x8x128xbf16, #tpu.memory_space<vmem>>, vector<1x8x128xbf16>,
    %c4_i32 = arith.constant 4 : i32
    %62 = arith.index_cast %c4_i32 : i32 to index
    %c0_35 = arith.constant 0 : index
    %c0_36 = arith.constant 0 : index
    %63 = vector.load %arg10[%62, %c0_35, %c0_36] : memref<8x8x128xbf16, #tpu.memory_space<vmem>>, vector<1x8x128xbf16>
    %64 = vector.shape_cast %63 : vector<1x8x128xbf16> to vector<8x128xbf16>
    %65 = arith.extf %64 : vector<8x128xbf16> to vector<8x128xf32>
    %cst_37 = arith.constant dense<0.000000e+00> : vector<8x128xf32>
    %66 = tpu.matmul %57, %12, %cst_37 {dimension_numbers = #tpu.dot_dimension_numbers<[1], [0], [0], [1], [0, 0, 1, 1], [], []>} : vector<8x128xbf16>, vector<128x128xbf16>, vector<8x128xf32> -> vector<8x128xf32>
    %67 = arith.addf %65, %66 : vector<8x128xf32>
    %68 = math.tanh %67 : vector<8x128xf32>
    %69 = arith.truncf %68 : vector<8x128xf32> to vector<8x128xbf16>
    %70 = arith.index_cast %c4_i32 : i32 to index
    %c0_38 = arith.constant 0 : index
    %c0_39 = arith.constant 0 : index
    %71 = vector.load %arg10[%70, %c0_38, %c0_39] : memref<8x8x128xbf16, #tpu.memory_space<vmem>>, vector<1x8x128xbf16>
    %72 = vector.shape_cast %71 : vector<1x8x128xbf16> to vector<8x128xbf16>
    %73 = vector.shape_cast %69 : vector<8x128xbf16> to vector<1x8x128xbf16>
    tpu.vector_store %arg10[%70, %c0_38, %c0_39], %73 {strides = array<i32>} : memref<8x8x128xbf16, #tpu.memory_space<vmem>>, vector<1x8x128xbf16>,
    %c5_i32 = arith.constant 5 : i32
    %74 = arith.index_cast %c5_i32 : i32 to index
    %c0_40 = arith.constant 0 : index
    %c0_41 = arith.constant 0 : index
    %75 = vector.load %arg10[%74, %c0_40, %c0_41] : memref<8x8x128xbf16, #tpu.memory_space<vmem>>, vector<1x8x128xbf16>
    %76 = vector.shape_cast %75 : vector<1x8x128xbf16> to vector<8x128xbf16>
    %77 = arith.extf %76 : vector<8x128xbf16> to vector<8x128xf32>
    %cst_42 = arith.constant dense<0.000000e+00> : vector<8x128xf32>
    %78 = tpu.matmul %69, %12, %cst_42 {dimension_numbers = #tpu.dot_dimension_numbers<[1], [0], [0], [1], [0, 0, 1, 1], [], []>} : vector<8x128xbf16>, vector<128x128xbf16>, vector<8x128xf32> -> vector<8x128xf32>
    %79 = arith.addf %77, %78 : vector<8x128xf32>
    %80 = math.tanh %79 : vector<8x128xf32>
    %81 = arith.truncf %80 : vector<8x128xf32> to vector<8x128xbf16>
    %82 = arith.index_cast %c5_i32 : i32 to index
    %c0_43 = arith.constant 0 : index
    %c0_44 = arith.constant 0 : index
    %83 = vector.load %arg10[%82, %c0_43, %c0_44] : memref<8x8x128xbf16, #tpu.memory_space<vmem>>, vector<1x8x128xbf16>
    %84 = vector.shape_cast %83 : vector<1x8x128xbf16> to vector<8x128xbf16>
    %85 = vector.shape_cast %81 : vector<8x128xbf16> to vector<1x8x128xbf16>
    tpu.vector_store %arg10[%82, %c0_43, %c0_44], %85 {strides = array<i32>} : memref<8x8x128xbf16, #tpu.memory_space<vmem>>, vector<1x8x128xbf16>,
    %c6_i32 = arith.constant 6 : i32
    %86 = arith.index_cast %c6_i32 : i32 to index
    %c0_45 = arith.constant 0 : index
    %c0_46 = arith.constant 0 : index
    %87 = vector.load %arg10[%86, %c0_45, %c0_46] : memref<8x8x128xbf16, #tpu.memory_space<vmem>>, vector<1x8x128xbf16>
    %88 = vector.shape_cast %87 : vector<1x8x128xbf16> to vector<8x128xbf16>
    %89 = arith.extf %88 : vector<8x128xbf16> to vector<8x128xf32>
    %cst_47 = arith.constant dense<0.000000e+00> : vector<8x128xf32>
    %90 = tpu.matmul %81, %12, %cst_47 {dimension_numbers = #tpu.dot_dimension_numbers<[1], [0], [0], [1], [0, 0, 1, 1], [], []>} : vector<8x128xbf16>, vector<128x128xbf16>, vector<8x128xf32> -> vector<8x128xf32>
    %91 = arith.addf %89, %90 : vector<8x128xf32>
    %92 = math.tanh %91 : vector<8x128xf32>
    %93 = arith.truncf %92 : vector<8x128xf32> to vector<8x128xbf16>
    %94 = arith.index_cast %c6_i32 : i32 to index
    %c0_48 = arith.constant 0 : index
    %c0_49 = arith.constant 0 : index
    %95 = vector.load %arg10[%94, %c0_48, %c0_49] : memref<8x8x128xbf16, #tpu.memory_space<vmem>>, vector<1x8x128xbf16>
    %96 = vector.shape_cast %95 : vector<1x8x128xbf16> to vector<8x128xbf16>
    %97 = vector.shape_cast %93 : vector<8x128xbf16> to vector<1x8x128xbf16>
    tpu.vector_store %arg10[%94, %c0_48, %c0_49], %97 {strides = array<i32>} : memref<8x8x128xbf16, #tpu.memory_space<vmem>>, vector<1x8x128xbf16>,
    %c7_i32 = arith.constant 7 : i32
    %98 = arith.index_cast %c7_i32 : i32 to index
    %c0_50 = arith.constant 0 : index
    %c0_51 = arith.constant 0 : index
    %99 = vector.load %arg10[%98, %c0_50, %c0_51] : memref<8x8x128xbf16, #tpu.memory_space<vmem>>, vector<1x8x128xbf16>
    %100 = vector.shape_cast %99 : vector<1x8x128xbf16> to vector<8x128xbf16>
    %101 = arith.extf %100 : vector<8x128xbf16> to vector<8x128xf32>
    %cst_52 = arith.constant dense<0.000000e+00> : vector<8x128xf32>
    %102 = tpu.matmul %93, %12, %cst_52 {dimension_numbers = #tpu.dot_dimension_numbers<[1], [0], [0], [1], [0, 0, 1, 1], [], []>} : vector<8x128xbf16>, vector<128x128xbf16>, vector<8x128xf32> -> vector<8x128xf32>
    %103 = arith.addf %101, %102 : vector<8x128xf32>
    %104 = math.tanh %103 : vector<8x128xf32>
    %105 = arith.truncf %104 : vector<8x128xf32> to vector<8x128xbf16>
    %106 = arith.index_cast %c7_i32 : i32 to index
    %c0_53 = arith.constant 0 : index
    %c0_54 = arith.constant 0 : index
    %107 = vector.load %arg10[%106, %c0_53, %c0_54] : memref<8x8x128xbf16, #tpu.memory_space<vmem>>, vector<1x8x128xbf16>
    %108 = vector.shape_cast %107 : vector<1x8x128xbf16> to vector<8x128xbf16>
    %109 = vector.shape_cast %105 : vector<8x128xbf16> to vector<1x8x128xbf16>
    tpu.vector_store %arg10[%106, %c0_53, %c0_54], %109 {strides = array<i32>} : memref<8x8x128xbf16, #tpu.memory_space<vmem>>, vector<1x8x128xbf16>,
    %c8_i32 = arith.constant 8 : i32
    %c0_55 = arith.constant 0 : index
    %c0_56 = arith.constant 0 : index
    %c0_57 = arith.constant 0 : index
    %110 = vector.load %arg4[%c0_55, %c0_56, %c0_57] : memref<3x128x128xbf16, #tpu.memory_space<vmem>>, vector<1x128x128xbf16>
    %111 = vector.shape_cast %110 : vector<1x128x128xbf16> to vector<128x128xbf16>
    %c1 = arith.constant 1 : index
    %c0_58 = arith.constant 0 : index
    %112 = vector.load %arg6[%c1, %c0_58] : memref<4x128xf32, #tpu.memory_space<vmem>>, vector<1x128xf32>
    %c0_59 = arith.constant 0 : index
    %c0_60 = arith.constant 0 : index
    %c0_61 = arith.constant 0 : index
    %113 = vector.load %arg10[%c0_59, %c0_60, %c0_61] : memref<8x8x128xbf16, #tpu.memory_space<vmem>>, vector<8x8x128xbf16>
    %114 = vector.shape_cast %113 : vector<8x8x128xbf16> to vector<64x128xbf16>
    %cst_62 = arith.constant dense<0.000000e+00> : vector<64x128xf32>
    %115 = tpu.matmul %114, %111, %cst_62 {dimension_numbers = #tpu.dot_dimension_numbers<[1], [0], [0], [1], [0, 0, 1, 1], [], []>} : vector<64x128xbf16>, vector<128x128xbf16>, vector<64x128xf32> -> vector<64x128xf32>
    %116 = vector.broadcast %112 : vector<1x128xf32> to vector<64x128xf32>
    %117 = arith.addf %115, %116 : vector<64x128xf32>
    %118 = arith.truncf %117 : vector<64x128xf32> to vector<64x128xbf16>
    %119 = vector.shape_cast %118 : vector<64x128xbf16> to vector<8x8x128xbf16>
    %c0_63 = arith.constant 0 : index
    %c0_64 = arith.constant 0 : index
    %c0_65 = arith.constant 0 : index
    %120 = vector.load %arg10[%c0_63, %c0_64, %c0_65] : memref<8x8x128xbf16, #tpu.memory_space<vmem>>, vector<8x8x128xbf16>
    tpu.vector_store %arg10[%c0_63, %c0_64, %c0_65], %119 {strides = array<i32>} : memref<8x8x128xbf16, #tpu.memory_space<vmem>>, vector<8x8x128xbf16>,
    %c1_66 = arith.constant 1 : index
    %c0_67 = arith.constant 0 : index
    %c0_68 = arith.constant 0 : index
    %121 = vector.load %arg5[%c1_66, %c0_67, %c0_68] : memref<4x128x128xbf16, #tpu.memory_space<vmem>>, vector<1x128x128xbf16>
    %122 = vector.shape_cast %121 : vector<1x128x128xbf16> to vector<128x128xbf16>
    %cst_69 = arith.constant 0.000000e+00 : bf16
    %123 = vector.broadcast %cst_69 : bf16 to vector<8x128xbf16>
    %c0_i32_70 = arith.constant 0 : i32
    %124 = arith.index_cast %c0_i32_70 : i32 to index
    %c0_71 = arith.constant 0 : index
    %c0_72 = arith.constant 0 : index
    %125 = vector.load %arg10[%124, %c0_71, %c0_72] : memref<8x8x128xbf16, #tpu.memory_space<vmem>>, vector<1x8x128xbf16>
    %126 = vector.shape_cast %125 : vector<1x8x128xbf16> to vector<8x128xbf16>
    %127 = arith.extf %126 : vector<8x128xbf16> to vector<8x128xf32>
    %cst_73 = arith.constant dense<0.000000e+00> : vector<8x128xf32>
    %128 = tpu.matmul %123, %122, %cst_73 {dimension_numbers = #tpu.dot_dimension_numbers<[1], [0], [0], [1], [0, 0, 1, 1], [], []>} : vector<8x128xbf16>, vector<128x128xbf16>, vector<8x128xf32> -> vector<8x128xf32>
    %129 = arith.addf %127, %128 : vector<8x128xf32>
    %130 = math.tanh %129 : vector<8x128xf32>
    %131 = arith.truncf %130 : vector<8x128xf32> to vector<8x128xbf16>
    %132 = arith.index_cast %c0_i32_70 : i32 to index
    %c0_74 = arith.constant 0 : index
    %c0_75 = arith.constant 0 : index
    %133 = vector.load %arg10[%132, %c0_74, %c0_75] : memref<8x8x128xbf16, #tpu.memory_space<vmem>>, vector<1x8x128xbf16>
    %134 = vector.shape_cast %133 : vector<1x8x128xbf16> to vector<8x128xbf16>
    %135 = vector.shape_cast %131 : vector<8x128xbf16> to vector<1x8x128xbf16>
    tpu.vector_store %arg10[%132, %c0_74, %c0_75], %135 {strides = array<i32>} : memref<8x8x128xbf16, #tpu.memory_space<vmem>>, vector<1x8x128xbf16>,
    %c1_i32_76 = arith.constant 1 : i32
    %136 = arith.index_cast %c1_i32_76 : i32 to index
    %c0_77 = arith.constant 0 : index
    %c0_78 = arith.constant 0 : index
    %137 = vector.load %arg10[%136, %c0_77, %c0_78] : memref<8x8x128xbf16, #tpu.memory_space<vmem>>, vector<1x8x128xbf16>
    %138 = vector.shape_cast %137 : vector<1x8x128xbf16> to vector<8x128xbf16>
    %139 = arith.extf %138 : vector<8x128xbf16> to vector<8x128xf32>
    %cst_79 = arith.constant dense<0.000000e+00> : vector<8x128xf32>
    %140 = tpu.matmul %131, %122, %cst_79 {dimension_numbers = #tpu.dot_dimension_numbers<[1], [0], [0], [1], [0, 0, 1, 1], [], []>} : vector<8x128xbf16>, vector<128x128xbf16>, vector<8x128xf32> -> vector<8x128xf32>
    %141 = arith.addf %139, %140 : vector<8x128xf32>
    %142 = math.tanh %141 : vector<8x128xf32>
    %143 = arith.truncf %142 : vector<8x128xf32> to vector<8x128xbf16>
    %144 = arith.index_cast %c1_i32_76 : i32 to index
    %c0_80 = arith.constant 0 : index
    %c0_81 = arith.constant 0 : index
    %145 = vector.load %arg10[%144, %c0_80, %c0_81] : memref<8x8x128xbf16, #tpu.memory_space<vmem>>, vector<1x8x128xbf16>
    %146 = vector.shape_cast %145 : vector<1x8x128xbf16> to vector<8x128xbf16>
    %147 = vector.shape_cast %143 : vector<8x128xbf16> to vector<1x8x128xbf16>
    tpu.vector_store %arg10[%144, %c0_80, %c0_81], %147 {strides = array<i32>} : memref<8x8x128xbf16, #tpu.memory_space<vmem>>, vector<1x8x128xbf16>,
    %c2_i32_82 = arith.constant 2 : i32
    %148 = arith.index_cast %c2_i32_82 : i32 to index
    %c0_83 = arith.constant 0 : index
    %c0_84 = arith.constant 0 : index
    %149 = vector.load %arg10[%148, %c0_83, %c0_84] : memref<8x8x128xbf16, #tpu.memory_space<vmem>>, vector<1x8x128xbf16>
    %150 = vector.shape_cast %149 : vector<1x8x128xbf16> to vector<8x128xbf16>
    %151 = arith.extf %150 : vector<8x128xbf16> to vector<8x128xf32>
    %cst_85 = arith.constant dense<0.000000e+00> : vector<8x128xf32>
    %152 = tpu.matmul %143, %122, %cst_85 {dimension_numbers = #tpu.dot_dimension_numbers<[1], [0], [0], [1], [0, 0, 1, 1], [], []>} : vector<8x128xbf16>, vector<128x128xbf16>, vector<8x128xf32> -> vector<8x128xf32>
    %153 = arith.addf %151, %152 : vector<8x128xf32>
    %154 = math.tanh %153 : vector<8x128xf32>
    %155 = arith.truncf %154 : vector<8x128xf32> to vector<8x128xbf16>
    %156 = arith.index_cast %c2_i32_82 : i32 to index
    %c0_86 = arith.constant 0 : index
    %c0_87 = arith.constant 0 : index
    %157 = vector.load %arg10[%156, %c0_86, %c0_87] : memref<8x8x128xbf16, #tpu.memory_space<vmem>>, vector<1x8x128xbf16>
    %158 = vector.shape_cast %157 : vector<1x8x128xbf16> to vector<8x128xbf16>
    %159 = vector.shape_cast %155 : vector<8x128xbf16> to vector<1x8x128xbf16>
    tpu.vector_store %arg10[%156, %c0_86, %c0_87], %159 {strides = array<i32>} : memref<8x8x128xbf16, #tpu.memory_space<vmem>>, vector<1x8x128xbf16>,
    %c3_i32_88 = arith.constant 3 : i32
    %160 = arith.index_cast %c3_i32_88 : i32 to index
    %c0_89 = arith.constant 0 : index
    %c0_90 = arith.constant 0 : index
    %161 = vector.load %arg10[%160, %c0_89, %c0_90] : memref<8x8x128xbf16, #tpu.memory_space<vmem>>, vector<1x8x128xbf16>
    %162 = vector.shape_cast %161 : vector<1x8x128xbf16> to vector<8x128xbf16>
    %163 = arith.extf %162 : vector<8x128xbf16> to vector<8x128xf32>
    %cst_91 = arith.constant dense<0.000000e+00> : vector<8x128xf32>
    %164 = tpu.matmul %155, %122, %cst_91 {dimension_numbers = #tpu.dot_dimension_numbers<[1], [0], [0], [1], [0, 0, 1, 1], [], []>} : vector<8x128xbf16>, vector<128x128xbf16>, vector<8x128xf32> -> vector<8x128xf32>
    %165 = arith.addf %163, %164 : vector<8x128xf32>
    %166 = math.tanh %165 : vector<8x128xf32>
    %167 = arith.truncf %166 : vector<8x128xf32> to vector<8x128xbf16>
    %168 = arith.index_cast %c3_i32_88 : i32 to index
    %c0_92 = arith.constant 0 : index
    %c0_93 = arith.constant 0 : index
    %169 = vector.load %arg10[%168, %c0_92, %c0_93] : memref<8x8x128xbf16, #tpu.memory_space<vmem>>, vector<1x8x128xbf16>
    %170 = vector.shape_cast %169 : vector<1x8x128xbf16> to vector<8x128xbf16>
    %171 = vector.shape_cast %167 : vector<8x128xbf16> to vector<1x8x128xbf16>
    tpu.vector_store %arg10[%168, %c0_92, %c0_93], %171 {strides = array<i32>} : memref<8x8x128xbf16, #tpu.memory_space<vmem>>, vector<1x8x128xbf16>,
    %c4_i32_94 = arith.constant 4 : i32
    %172 = arith.index_cast %c4_i32_94 : i32 to index
    %c0_95 = arith.constant 0 : index
    %c0_96 = arith.constant 0 : index
    %173 = vector.load %arg10[%172, %c0_95, %c0_96] : memref<8x8x128xbf16, #tpu.memory_space<vmem>>, vector<1x8x128xbf16>
    %174 = vector.shape_cast %173 : vector<1x8x128xbf16> to vector<8x128xbf16>
    %175 = arith.extf %174 : vector<8x128xbf16> to vector<8x128xf32>
    %cst_97 = arith.constant dense<0.000000e+00> : vector<8x128xf32>
    %176 = tpu.matmul %167, %122, %cst_97 {dimension_numbers = #tpu.dot_dimension_numbers<[1], [0], [0], [1], [0, 0, 1, 1], [], []>} : vector<8x128xbf16>, vector<128x128xbf16>, vector<8x128xf32> -> vector<8x128xf32>
    %177 = arith.addf %175, %176 : vector<8x128xf32>
    %178 = math.tanh %177 : vector<8x128xf32>
    %179 = arith.truncf %178 : vector<8x128xf32> to vector<8x128xbf16>
    %180 = arith.index_cast %c4_i32_94 : i32 to index
    %c0_98 = arith.constant 0 : index
    %c0_99 = arith.constant 0 : index
    %181 = vector.load %arg10[%180, %c0_98, %c0_99] : memref<8x8x128xbf16, #tpu.memory_space<vmem>>, vector<1x8x128xbf16>
    %182 = vector.shape_cast %181 : vector<1x8x128xbf16> to vector<8x128xbf16>
    %183 = vector.shape_cast %179 : vector<8x128xbf16> to vector<1x8x128xbf16>
    tpu.vector_store %arg10[%180, %c0_98, %c0_99], %183 {strides = array<i32>} : memref<8x8x128xbf16, #tpu.memory_space<vmem>>, vector<1x8x128xbf16>,
    %c5_i32_100 = arith.constant 5 : i32
    %184 = arith.index_cast %c5_i32_100 : i32 to index
    %c0_101 = arith.constant 0 : index
    %c0_102 = arith.constant 0 : index
    %185 = vector.load %arg10[%184, %c0_101, %c0_102] : memref<8x8x128xbf16, #tpu.memory_space<vmem>>, vector<1x8x128xbf16>
    %186 = vector.shape_cast %185 : vector<1x8x128xbf16> to vector<8x128xbf16>
    %187 = arith.extf %186 : vector<8x128xbf16> to vector<8x128xf32>
    %cst_103 = arith.constant dense<0.000000e+00> : vector<8x128xf32>
    %188 = tpu.matmul %179, %122, %cst_103 {dimension_numbers = #tpu.dot_dimension_numbers<[1], [0], [0], [1], [0, 0, 1, 1], [], []>} : vector<8x128xbf16>, vector<128x128xbf16>, vector<8x128xf32> -> vector<8x128xf32>
    %189 = arith.addf %187, %188 : vector<8x128xf32>
    %190 = math.tanh %189 : vector<8x128xf32>
    %191 = arith.truncf %190 : vector<8x128xf32> to vector<8x128xbf16>
    %192 = arith.index_cast %c5_i32_100 : i32 to index
    %c0_104 = arith.constant 0 : index
    %c0_105 = arith.constant 0 : index
    %193 = vector.load %arg10[%192, %c0_104, %c0_105] : memref<8x8x128xbf16, #tpu.memory_space<vmem>>, vector<1x8x128xbf16>
    %194 = vector.shape_cast %193 : vector<1x8x128xbf16> to vector<8x128xbf16>
    %195 = vector.shape_cast %191 : vector<8x128xbf16> to vector<1x8x128xbf16>
    tpu.vector_store %arg10[%192, %c0_104, %c0_105], %195 {strides = array<i32>} : memref<8x8x128xbf16, #tpu.memory_space<vmem>>, vector<1x8x128xbf16>,
    %c6_i32_106 = arith.constant 6 : i32
    %196 = arith.index_cast %c6_i32_106 : i32 to index
    %c0_107 = arith.constant 0 : index
    %c0_108 = arith.constant 0 : index
    %197 = vector.load %arg10[%196, %c0_107, %c0_108] : memref<8x8x128xbf16, #tpu.memory_space<vmem>>, vector<1x8x128xbf16>
    %198 = vector.shape_cast %197 : vector<1x8x128xbf16> to vector<8x128xbf16>
    %199 = arith.extf %198 : vector<8x128xbf16> to vector<8x128xf32>
    %cst_109 = arith.constant dense<0.000000e+00> : vector<8x128xf32>
    %200 = tpu.matmul %191, %122, %cst_109 {dimension_numbers = #tpu.dot_dimension_numbers<[1], [0], [0], [1], [0, 0, 1, 1], [], []>} : vector<8x128xbf16>, vector<128x128xbf16>, vector<8x128xf32> -> vector<8x128xf32>
    %201 = arith.addf %199, %200 : vector<8x128xf32>
    %202 = math.tanh %201 : vector<8x128xf32>
    %203 = arith.truncf %202 : vector<8x128xf32> to vector<8x128xbf16>
    %204 = arith.index_cast %c6_i32_106 : i32 to index
    %c0_110 = arith.constant 0 : index
    %c0_111 = arith.constant 0 : index
    %205 = vector.load %arg10[%204, %c0_110, %c0_111] : memref<8x8x128xbf16, #tpu.memory_space<vmem>>, vector<1x8x128xbf16>
    %206 = vector.shape_cast %205 : vector<1x8x128xbf16> to vector<8x128xbf16>
    %207 = vector.shape_cast %203 : vector<8x128xbf16> to vector<1x8x128xbf16>
    tpu.vector_store %arg10[%204, %c0_110, %c0_111], %207 {strides = array<i32>} : memref<8x8x128xbf16, #tpu.memory_space<vmem>>, vector<1x8x128xbf16>,
    %c7_i32_112 = arith.constant 7 : i32
    %208 = arith.index_cast %c7_i32_112 : i32 to index
    %c0_113 = arith.constant 0 : index
    %c0_114 = arith.constant 0 : index
    %209 = vector.load %arg10[%208, %c0_113, %c0_114] : memref<8x8x128xbf16, #tpu.memory_space<vmem>>, vector<1x8x128xbf16>
    %210 = vector.shape_cast %209 : vector<1x8x128xbf16> to vector<8x128xbf16>
    %211 = arith.extf %210 : vector<8x128xbf16> to vector<8x128xf32>
    %cst_115 = arith.constant dense<0.000000e+00> : vector<8x128xf32>
    %212 = tpu.matmul %203, %122, %cst_115 {dimension_numbers = #tpu.dot_dimension_numbers<[1], [0], [0], [1], [0, 0, 1, 1], [], []>} : vector<8x128xbf16>, vector<128x128xbf16>, vector<8x128xf32> -> vector<8x128xf32>
    %213 = arith.addf %211, %212 : vector<8x128xf32>
    %214 = math.tanh %213 : vector<8x128xf32>
    %215 = arith.truncf %214 : vector<8x128xf32> to vector<8x128xbf16>
    %216 = arith.index_cast %c7_i32_112 : i32 to index
    %c0_116 = arith.constant 0 : index
    %c0_117 = arith.constant 0 : index
    %217 = vector.load %arg10[%216, %c0_116, %c0_117] : memref<8x8x128xbf16, #tpu.memory_space<vmem>>, vector<1x8x128xbf16>
    %218 = vector.shape_cast %217 : vector<1x8x128xbf16> to vector<8x128xbf16>
    %219 = vector.shape_cast %215 : vector<8x128xbf16> to vector<1x8x128xbf16>
    tpu.vector_store %arg10[%216, %c0_116, %c0_117], %219 {strides = array<i32>} : memref<8x8x128xbf16, #tpu.memory_space<vmem>>, vector<1x8x128xbf16>,
    %c8_i32_118 = arith.constant 8 : i32
    %c1_119 = arith.constant 1 : index
    %c0_120 = arith.constant 0 : index
    %c0_121 = arith.constant 0 : index
    %220 = vector.load %arg4[%c1_119, %c0_120, %c0_121] : memref<3x128x128xbf16, #tpu.memory_space<vmem>>, vector<1x128x128xbf16>
    %221 = vector.shape_cast %220 : vector<1x128x128xbf16> to vector<128x128xbf16>
    %c2 = arith.constant 2 : index
    %c0_122 = arith.constant 0 : index
    %222 = vector.load %arg6[%c2, %c0_122] : memref<4x128xf32, #tpu.memory_space<vmem>>, vector<1x128xf32>
    %c0_123 = arith.constant 0 : index
    %c0_124 = arith.constant 0 : index
    %c0_125 = arith.constant 0 : index
    %223 = vector.load %arg10[%c0_123, %c0_124, %c0_125] : memref<8x8x128xbf16, #tpu.memory_space<vmem>>, vector<8x8x128xbf16>
    %224 = vector.shape_cast %223 : vector<8x8x128xbf16> to vector<64x128xbf16>
    %cst_126 = arith.constant dense<0.000000e+00> : vector<64x128xf32>
    %225 = tpu.matmul %224, %221, %cst_126 {dimension_numbers = #tpu.dot_dimension_numbers<[1], [0], [0], [1], [0, 0, 1, 1], [], []>} : vector<64x128xbf16>, vector<128x128xbf16>, vector<64x128xf32> -> vector<64x128xf32>
    %226 = vector.broadcast %222 : vector<1x128xf32> to vector<64x128xf32>
    %227 = arith.addf %225, %226 : vector<64x128xf32>
    %228 = arith.truncf %227 : vector<64x128xf32> to vector<64x128xbf16>
    %229 = vector.shape_cast %228 : vector<64x128xbf16> to vector<8x8x128xbf16>
    %c0_127 = arith.constant 0 : index
    %c0_128 = arith.constant 0 : index
    %c0_129 = arith.constant 0 : index
    %230 = vector.load %arg10[%c0_127, %c0_128, %c0_129] : memref<8x8x128xbf16, #tpu.memory_space<vmem>>, vector<8x8x128xbf16>
    tpu.vector_store %arg10[%c0_127, %c0_128, %c0_129], %229 {strides = array<i32>} : memref<8x8x128xbf16, #tpu.memory_space<vmem>>, vector<8x8x128xbf16>,
    %c2_130 = arith.constant 2 : index
    %c0_131 = arith.constant 0 : index
    %c0_132 = arith.constant 0 : index
    %231 = vector.load %arg5[%c2_130, %c0_131, %c0_132] : memref<4x128x128xbf16, #tpu.memory_space<vmem>>, vector<1x128x128xbf16>
    %232 = vector.shape_cast %231 : vector<1x128x128xbf16> to vector<128x128xbf16>
    %cst_133 = arith.constant 0.000000e+00 : bf16
    %233 = vector.broadcast %cst_133 : bf16 to vector<8x128xbf16>
    %c0_i32_134 = arith.constant 0 : i32
    %234 = arith.index_cast %c0_i32_134 : i32 to index
    %c0_135 = arith.constant 0 : index
    %c0_136 = arith.constant 0 : index
    %235 = vector.load %arg10[%234, %c0_135, %c0_136] : memref<8x8x128xbf16, #tpu.memory_space<vmem>>, vector<1x8x128xbf16>
    %236 = vector.shape_cast %235 : vector<1x8x128xbf16> to vector<8x128xbf16>
    %237 = arith.extf %236 : vector<8x128xbf16> to vector<8x128xf32>
    %cst_137 = arith.constant dense<0.000000e+00> : vector<8x128xf32>
    %238 = tpu.matmul %233, %232, %cst_137 {dimension_numbers = #tpu.dot_dimension_numbers<[1], [0], [0], [1], [0, 0, 1, 1], [], []>} : vector<8x128xbf16>, vector<128x128xbf16>, vector<8x128xf32> -> vector<8x128xf32>
    %239 = arith.addf %237, %238 : vector<8x128xf32>
    %240 = math.tanh %239 : vector<8x128xf32>
    %241 = arith.truncf %240 : vector<8x128xf32> to vector<8x128xbf16>
    %242 = arith.index_cast %c0_i32_134 : i32 to index
    %c0_138 = arith.constant 0 : index
    %c0_139 = arith.constant 0 : index
    %243 = vector.load %arg10[%242, %c0_138, %c0_139] : memref<8x8x128xbf16, #tpu.memory_space<vmem>>, vector<1x8x128xbf16>
    %244 = vector.shape_cast %243 : vector<1x8x128xbf16> to vector<8x128xbf16>
    %245 = vector.shape_cast %241 : vector<8x128xbf16> to vector<1x8x128xbf16>
    tpu.vector_store %arg10[%242, %c0_138, %c0_139], %245 {strides = array<i32>} : memref<8x8x128xbf16, #tpu.memory_space<vmem>>, vector<1x8x128xbf16>,
    %c1_i32_140 = arith.constant 1 : i32
    %246 = arith.index_cast %c1_i32_140 : i32 to index
    %c0_141 = arith.constant 0 : index
    %c0_142 = arith.constant 0 : index
    %247 = vector.load %arg10[%246, %c0_141, %c0_142] : memref<8x8x128xbf16, #tpu.memory_space<vmem>>, vector<1x8x128xbf16>
    %248 = vector.shape_cast %247 : vector<1x8x128xbf16> to vector<8x128xbf16>
    %249 = arith.extf %248 : vector<8x128xbf16> to vector<8x128xf32>
    %cst_143 = arith.constant dense<0.000000e+00> : vector<8x128xf32>
    %250 = tpu.matmul %241, %232, %cst_143 {dimension_numbers = #tpu.dot_dimension_numbers<[1], [0], [0], [1], [0, 0, 1, 1], [], []>} : vector<8x128xbf16>, vector<128x128xbf16>, vector<8x128xf32> -> vector<8x128xf32>
    %251 = arith.addf %249, %250 : vector<8x128xf32>
    %252 = math.tanh %251 : vector<8x128xf32>
    %253 = arith.truncf %252 : vector<8x128xf32> to vector<8x128xbf16>
    %254 = arith.index_cast %c1_i32_140 : i32 to index
    %c0_144 = arith.constant 0 : index
    %c0_145 = arith.constant 0 : index
    %255 = vector.load %arg10[%254, %c0_144, %c0_145] : memref<8x8x128xbf16, #tpu.memory_space<vmem>>, vector<1x8x128xbf16>
    %256 = vector.shape_cast %255 : vector<1x8x128xbf16> to vector<8x128xbf16>
    %257 = vector.shape_cast %253 : vector<8x128xbf16> to vector<1x8x128xbf16>
    tpu.vector_store %arg10[%254, %c0_144, %c0_145], %257 {strides = array<i32>} : memref<8x8x128xbf16, #tpu.memory_space<vmem>>, vector<1x8x128xbf16>,
    %c2_i32_146 = arith.constant 2 : i32
    %258 = arith.index_cast %c2_i32_146 : i32 to index
    %c0_147 = arith.constant 0 : index
    %c0_148 = arith.constant 0 : index
    %259 = vector.load %arg10[%258, %c0_147, %c0_148] : memref<8x8x128xbf16, #tpu.memory_space<vmem>>, vector<1x8x128xbf16>
    %260 = vector.shape_cast %259 : vector<1x8x128xbf16> to vector<8x128xbf16>
    %261 = arith.extf %260 : vector<8x128xbf16> to vector<8x128xf32>
    %cst_149 = arith.constant dense<0.000000e+00> : vector<8x128xf32>
    %262 = tpu.matmul %253, %232, %cst_149 {dimension_numbers = #tpu.dot_dimension_numbers<[1], [0], [0], [1], [0, 0, 1, 1], [], []>} : vector<8x128xbf16>, vector<128x128xbf16>, vector<8x128xf32> -> vector<8x128xf32>
    %263 = arith.addf %261, %262 : vector<8x128xf32>
    %264 = math.tanh %263 : vector<8x128xf32>
    %265 = arith.truncf %264 : vector<8x128xf32> to vector<8x128xbf16>
    %266 = arith.index_cast %c2_i32_146 : i32 to index
    %c0_150 = arith.constant 0 : index
    %c0_151 = arith.constant 0 : index
    %267 = vector.load %arg10[%266, %c0_150, %c0_151] : memref<8x8x128xbf16, #tpu.memory_space<vmem>>, vector<1x8x128xbf16>
    %268 = vector.shape_cast %267 : vector<1x8x128xbf16> to vector<8x128xbf16>
    %269 = vector.shape_cast %265 : vector<8x128xbf16> to vector<1x8x128xbf16>
    tpu.vector_store %arg10[%266, %c0_150, %c0_151], %269 {strides = array<i32>} : memref<8x8x128xbf16, #tpu.memory_space<vmem>>, vector<1x8x128xbf16>,
    %c3_i32_152 = arith.constant 3 : i32
    %270 = arith.index_cast %c3_i32_152 : i32 to index
    %c0_153 = arith.constant 0 : index
    %c0_154 = arith.constant 0 : index
    %271 = vector.load %arg10[%270, %c0_153, %c0_154] : memref<8x8x128xbf16, #tpu.memory_space<vmem>>, vector<1x8x128xbf16>
    %272 = vector.shape_cast %271 : vector<1x8x128xbf16> to vector<8x128xbf16>
    %273 = arith.extf %272 : vector<8x128xbf16> to vector<8x128xf32>
    %cst_155 = arith.constant dense<0.000000e+00> : vector<8x128xf32>
    %274 = tpu.matmul %265, %232, %cst_155 {dimension_numbers = #tpu.dot_dimension_numbers<[1], [0], [0], [1], [0, 0, 1, 1], [], []>} : vector<8x128xbf16>, vector<128x128xbf16>, vector<8x128xf32> -> vector<8x128xf32>
    %275 = arith.addf %273, %274 : vector<8x128xf32>
    %276 = math.tanh %275 : vector<8x128xf32>
    %277 = arith.truncf %276 : vector<8x128xf32> to vector<8x128xbf16>
    %278 = arith.index_cast %c3_i32_152 : i32 to index
    %c0_156 = arith.constant 0 : index
    %c0_157 = arith.constant 0 : index
    %279 = vector.load %arg10[%278, %c0_156, %c0_157] : memref<8x8x128xbf16, #tpu.memory_space<vmem>>, vector<1x8x128xbf16>
    %280 = vector.shape_cast %279 : vector<1x8x128xbf16> to vector<8x128xbf16>
    %281 = vector.shape_cast %277 : vector<8x128xbf16> to vector<1x8x128xbf16>
    tpu.vector_store %arg10[%278, %c0_156, %c0_157], %281 {strides = array<i32>} : memref<8x8x128xbf16, #tpu.memory_space<vmem>>, vector<1x8x128xbf16>,
    %c4_i32_158 = arith.constant 4 : i32
    %282 = arith.index_cast %c4_i32_158 : i32 to index
    %c0_159 = arith.constant 0 : index
    %c0_160 = arith.constant 0 : index
    %283 = vector.load %arg10[%282, %c0_159, %c0_160] : memref<8x8x128xbf16, #tpu.memory_space<vmem>>, vector<1x8x128xbf16>
    %284 = vector.shape_cast %283 : vector<1x8x128xbf16> to vector<8x128xbf16>
    %285 = arith.extf %284 : vector<8x128xbf16> to vector<8x128xf32>
    %cst_161 = arith.constant dense<0.000000e+00> : vector<8x128xf32>
    %286 = tpu.matmul %277, %232, %cst_161 {dimension_numbers = #tpu.dot_dimension_numbers<[1], [0], [0], [1], [0, 0, 1, 1], [], []>} : vector<8x128xbf16>, vector<128x128xbf16>, vector<8x128xf32> -> vector<8x128xf32>
    %287 = arith.addf %285, %286 : vector<8x128xf32>
    %288 = math.tanh %287 : vector<8x128xf32>
    %289 = arith.truncf %288 : vector<8x128xf32> to vector<8x128xbf16>
    %290 = arith.index_cast %c4_i32_158 : i32 to index
    %c0_162 = arith.constant 0 : index
    %c0_163 = arith.constant 0 : index
    %291 = vector.load %arg10[%290, %c0_162, %c0_163] : memref<8x8x128xbf16, #tpu.memory_space<vmem>>, vector<1x8x128xbf16>
    %292 = vector.shape_cast %291 : vector<1x8x128xbf16> to vector<8x128xbf16>
    %293 = vector.shape_cast %289 : vector<8x128xbf16> to vector<1x8x128xbf16>
    tpu.vector_store %arg10[%290, %c0_162, %c0_163], %293 {strides = array<i32>} : memref<8x8x128xbf16, #tpu.memory_space<vmem>>, vector<1x8x128xbf16>,
    %c5_i32_164 = arith.constant 5 : i32
    %294 = arith.index_cast %c5_i32_164 : i32 to index
    %c0_165 = arith.constant 0 : index
    %c0_166 = arith.constant 0 : index
    %295 = vector.load %arg10[%294, %c0_165, %c0_166] : memref<8x8x128xbf16, #tpu.memory_space<vmem>>, vector<1x8x128xbf16>
    %296 = vector.shape_cast %295 : vector<1x8x128xbf16> to vector<8x128xbf16>
    %297 = arith.extf %296 : vector<8x128xbf16> to vector<8x128xf32>
    %cst_167 = arith.constant dense<0.000000e+00> : vector<8x128xf32>
    %298 = tpu.matmul %289, %232, %cst_167 {dimension_numbers = #tpu.dot_dimension_numbers<[1], [0], [0], [1], [0, 0, 1, 1], [], []>} : vector<8x128xbf16>, vector<128x128xbf16>, vector<8x128xf32> -> vector<8x128xf32>
    %299 = arith.addf %297, %298 : vector<8x128xf32>
    %300 = math.tanh %299 : vector<8x128xf32>
    %301 = arith.truncf %300 : vector<8x128xf32> to vector<8x128xbf16>
    %302 = arith.index_cast %c5_i32_164 : i32 to index
    %c0_168 = arith.constant 0 : index
    %c0_169 = arith.constant 0 : index
    %303 = vector.load %arg10[%302, %c0_168, %c0_169] : memref<8x8x128xbf16, #tpu.memory_space<vmem>>, vector<1x8x128xbf16>
    %304 = vector.shape_cast %303 : vector<1x8x128xbf16> to vector<8x128xbf16>
    %305 = vector.shape_cast %301 : vector<8x128xbf16> to vector<1x8x128xbf16>
    tpu.vector_store %arg10[%302, %c0_168, %c0_169], %305 {strides = array<i32>} : memref<8x8x128xbf16, #tpu.memory_space<vmem>>, vector<1x8x128xbf16>,
    %c6_i32_170 = arith.constant 6 : i32
    %306 = arith.index_cast %c6_i32_170 : i32 to index
    %c0_171 = arith.constant 0 : index
    %c0_172 = arith.constant 0 : index
    %307 = vector.load %arg10[%306, %c0_171, %c0_172] : memref<8x8x128xbf16, #tpu.memory_space<vmem>>, vector<1x8x128xbf16>
    %308 = vector.shape_cast %307 : vector<1x8x128xbf16> to vector<8x128xbf16>
    %309 = arith.extf %308 : vector<8x128xbf16> to vector<8x128xf32>
    %cst_173 = arith.constant dense<0.000000e+00> : vector<8x128xf32>
    %310 = tpu.matmul %301, %232, %cst_173 {dimension_numbers = #tpu.dot_dimension_numbers<[1], [0], [0], [1], [0, 0, 1, 1], [], []>} : vector<8x128xbf16>, vector<128x128xbf16>, vector<8x128xf32> -> vector<8x128xf32>
    %311 = arith.addf %309, %310 : vector<8x128xf32>
    %312 = math.tanh %311 : vector<8x128xf32>
    %313 = arith.truncf %312 : vector<8x128xf32> to vector<8x128xbf16>
    %314 = arith.index_cast %c6_i32_170 : i32 to index
    %c0_174 = arith.constant 0 : index
    %c0_175 = arith.constant 0 : index
    %315 = vector.load %arg10[%314, %c0_174, %c0_175] : memref<8x8x128xbf16, #tpu.memory_space<vmem>>, vector<1x8x128xbf16>
    %316 = vector.shape_cast %315 : vector<1x8x128xbf16> to vector<8x128xbf16>
    %317 = vector.shape_cast %313 : vector<8x128xbf16> to vector<1x8x128xbf16>
    tpu.vector_store %arg10[%314, %c0_174, %c0_175], %317 {strides = array<i32>} : memref<8x8x128xbf16, #tpu.memory_space<vmem>>, vector<1x8x128xbf16>,
    %c7_i32_176 = arith.constant 7 : i32
    %318 = arith.index_cast %c7_i32_176 : i32 to index
    %c0_177 = arith.constant 0 : index
    %c0_178 = arith.constant 0 : index
    %319 = vector.load %arg10[%318, %c0_177, %c0_178] : memref<8x8x128xbf16, #tpu.memory_space<vmem>>, vector<1x8x128xbf16>
    %320 = vector.shape_cast %319 : vector<1x8x128xbf16> to vector<8x128xbf16>
    %321 = arith.extf %320 : vector<8x128xbf16> to vector<8x128xf32>
    %cst_179 = arith.constant dense<0.000000e+00> : vector<8x128xf32>
    %322 = tpu.matmul %313, %232, %cst_179 {dimension_numbers = #tpu.dot_dimension_numbers<[1], [0], [0], [1], [0, 0, 1, 1], [], []>} : vector<8x128xbf16>, vector<128x128xbf16>, vector<8x128xf32> -> vector<8x128xf32>
    %323 = arith.addf %321, %322 : vector<8x128xf32>
    %324 = math.tanh %323 : vector<8x128xf32>
    %325 = arith.truncf %324 : vector<8x128xf32> to vector<8x128xbf16>
    %326 = arith.index_cast %c7_i32_176 : i32 to index
    %c0_180 = arith.constant 0 : index
    %c0_181 = arith.constant 0 : index
    %327 = vector.load %arg10[%326, %c0_180, %c0_181] : memref<8x8x128xbf16, #tpu.memory_space<vmem>>, vector<1x8x128xbf16>
    %328 = vector.shape_cast %327 : vector<1x8x128xbf16> to vector<8x128xbf16>
    %329 = vector.shape_cast %325 : vector<8x128xbf16> to vector<1x8x128xbf16>
    tpu.vector_store %arg10[%326, %c0_180, %c0_181], %329 {strides = array<i32>} : memref<8x8x128xbf16, #tpu.memory_space<vmem>>, vector<1x8x128xbf16>,
    %c8_i32_182 = arith.constant 8 : i32
    %c2_183 = arith.constant 2 : index
    %c0_184 = arith.constant 0 : index
    %c0_185 = arith.constant 0 : index
    %330 = vector.load %arg4[%c2_183, %c0_184, %c0_185] : memref<3x128x128xbf16, #tpu.memory_space<vmem>>, vector<1x128x128xbf16>
    %331 = vector.shape_cast %330 : vector<1x128x128xbf16> to vector<128x128xbf16>
    %c3 = arith.constant 3 : index
    %c0_186 = arith.constant 0 : index
    %332 = vector.load %arg6[%c3, %c0_186] : memref<4x128xf32, #tpu.memory_space<vmem>>, vector<1x128xf32>
    %c0_187 = arith.constant 0 : index
    %c0_188 = arith.constant 0 : index
    %c0_189 = arith.constant 0 : index
    %333 = vector.load %arg10[%c0_187, %c0_188, %c0_189] : memref<8x8x128xbf16, #tpu.memory_space<vmem>>, vector<8x8x128xbf16>
    %334 = vector.shape_cast %333 : vector<8x8x128xbf16> to vector<64x128xbf16>
    %cst_190 = arith.constant dense<0.000000e+00> : vector<64x128xf32>
    %335 = tpu.matmul %334, %331, %cst_190 {dimension_numbers = #tpu.dot_dimension_numbers<[1], [0], [0], [1], [0, 0, 1, 1], [], []>} : vector<64x128xbf16>, vector<128x128xbf16>, vector<64x128xf32> -> vector<64x128xf32>
    %336 = vector.broadcast %332 : vector<1x128xf32> to vector<64x128xf32>
    %337 = arith.addf %335, %336 : vector<64x128xf32>
    %338 = arith.truncf %337 : vector<64x128xf32> to vector<64x128xbf16>
    %339 = vector.shape_cast %338 : vector<64x128xbf16> to vector<8x8x128xbf16>
    %c0_191 = arith.constant 0 : index
    %c0_192 = arith.constant 0 : index
    %c0_193 = arith.constant 0 : index
    %340 = vector.load %arg10[%c0_191, %c0_192, %c0_193] : memref<8x8x128xbf16, #tpu.memory_space<vmem>>, vector<8x8x128xbf16>
    tpu.vector_store %arg10[%c0_191, %c0_192, %c0_193], %339 {strides = array<i32>} : memref<8x8x128xbf16, #tpu.memory_space<vmem>>, vector<8x8x128xbf16>,
    %c3_194 = arith.constant 3 : index
    %c0_195 = arith.constant 0 : index
    %c0_196 = arith.constant 0 : index
    %341 = vector.load %arg5[%c3_194, %c0_195, %c0_196] : memref<4x128x128xbf16, #tpu.memory_space<vmem>>, vector<1x128x128xbf16>
    %342 = vector.shape_cast %341 : vector<1x128x128xbf16> to vector<128x128xbf16>
    %cst_197 = arith.constant 0.000000e+00 : bf16
    %343 = vector.broadcast %cst_197 : bf16 to vector<8x128xbf16>
    %cst_198 = arith.constant 0.000000e+00 : f32
    %344 = vector.broadcast %cst_198 : f32 to vector<8x128xf32>
    %c0_i32_199 = arith.constant 0 : i32
    %345 = arith.index_cast %c0_i32_199 : i32 to index
    %c0_200 = arith.constant 0 : index
    %c0_201 = arith.constant 0 : index
    %346 = vector.load %arg10[%345, %c0_200, %c0_201] : memref<8x8x128xbf16, #tpu.memory_space<vmem>>, vector<1x8x128xbf16>
    %347 = vector.shape_cast %346 : vector<1x8x128xbf16> to vector<8x128xbf16>
    %348 = arith.extf %347 : vector<8x128xbf16> to vector<8x128xf32>
    %cst_202 = arith.constant dense<0.000000e+00> : vector<8x128xf32>
    %349 = tpu.matmul %343, %342, %cst_202 {dimension_numbers = #tpu.dot_dimension_numbers<[1], [0], [0], [1], [0, 0, 1, 1], [], []>} : vector<8x128xbf16>, vector<128x128xbf16>, vector<8x128xf32> -> vector<8x128xf32>
    %350 = arith.addf %348, %349 : vector<8x128xf32>
    %351 = math.tanh %350 : vector<8x128xf32>
    %352 = vector.broadcast %c0_i32_199 : i32 to vector<8x1xi32>
    %353 = arith.cmpi slt, %352, %0 : vector<8x1xi32>
    %354 = arith.extui %353 : vector<8x1xi1> to vector<8x1xi32>
    %355 = arith.sitofp %354 : vector<8x1xi32> to vector<8x1xf32>
    %356 = arith.truncf %351 : vector<8x128xf32> to vector<8x128xbf16>
    %357 = vector.broadcast %355 : vector<8x1xf32> to vector<8x128xf32>
    %358 = arith.mulf %351, %357 : vector<8x128xf32>
    %359 = arith.addf %344, %358 : vector<8x128xf32>
    %c1_i32_203 = arith.constant 1 : i32
    %360 = arith.index_cast %c1_i32_203 : i32 to index
    %c0_204 = arith.constant 0 : index
    %c0_205 = arith.constant 0 : index
    %361 = vector.load %arg10[%360, %c0_204, %c0_205] : memref<8x8x128xbf16, #tpu.memory_space<vmem>>, vector<1x8x128xbf16>
    %362 = vector.shape_cast %361 : vector<1x8x128xbf16> to vector<8x128xbf16>
    %363 = arith.extf %362 : vector<8x128xbf16> to vector<8x128xf32>
    %cst_206 = arith.constant dense<0.000000e+00> : vector<8x128xf32>
    %364 = tpu.matmul %356, %342, %cst_206 {dimension_numbers = #tpu.dot_dimension_numbers<[1], [0], [0], [1], [0, 0, 1, 1], [], []>} : vector<8x128xbf16>, vector<128x128xbf16>, vector<8x128xf32> -> vector<8x128xf32>
    %365 = arith.addf %363, %364 : vector<8x128xf32>
    %366 = math.tanh %365 : vector<8x128xf32>
    %367 = vector.broadcast %c1_i32_203 : i32 to vector<8x1xi32>
    %368 = arith.cmpi slt, %367, %0 : vector<8x1xi32>
    %369 = arith.extui %368 : vector<8x1xi1> to vector<8x1xi32>
    %370 = arith.sitofp %369 : vector<8x1xi32> to vector<8x1xf32>
    %371 = arith.truncf %366 : vector<8x128xf32> to vector<8x128xbf16>
    %372 = vector.broadcast %370 : vector<8x1xf32> to vector<8x128xf32>
    %373 = arith.mulf %366, %372 : vector<8x128xf32>
    %374 = arith.addf %359, %373 : vector<8x128xf32>
    %c2_i32_207 = arith.constant 2 : i32
    %375 = arith.index_cast %c2_i32_207 : i32 to index
    %c0_208 = arith.constant 0 : index
    %c0_209 = arith.constant 0 : index
    %376 = vector.load %arg10[%375, %c0_208, %c0_209] : memref<8x8x128xbf16, #tpu.memory_space<vmem>>, vector<1x8x128xbf16>
    %377 = vector.shape_cast %376 : vector<1x8x128xbf16> to vector<8x128xbf16>
    %378 = arith.extf %377 : vector<8x128xbf16> to vector<8x128xf32>
    %cst_210 = arith.constant dense<0.000000e+00> : vector<8x128xf32>
    %379 = tpu.matmul %371, %342, %cst_210 {dimension_numbers = #tpu.dot_dimension_numbers<[1], [0], [0], [1], [0, 0, 1, 1], [], []>} : vector<8x128xbf16>, vector<128x128xbf16>, vector<8x128xf32> -> vector<8x128xf32>
    %380 = arith.addf %378, %379 : vector<8x128xf32>
    %381 = math.tanh %380 : vector<8x128xf32>
    %382 = vector.broadcast %c2_i32_207 : i32 to vector<8x1xi32>
    %383 = arith.cmpi slt, %382, %0 : vector<8x1xi32>
    %384 = arith.extui %383 : vector<8x1xi1> to vector<8x1xi32>
    %385 = arith.sitofp %384 : vector<8x1xi32> to vector<8x1xf32>
    %386 = arith.truncf %381 : vector<8x128xf32> to vector<8x128xbf16>
    %387 = vector.broadcast %385 : vector<8x1xf32> to vector<8x128xf32>
    %388 = arith.mulf %381, %387 : vector<8x128xf32>
    %389 = arith.addf %374, %388 : vector<8x128xf32>
    %c3_i32_211 = arith.constant 3 : i32
    %390 = arith.index_cast %c3_i32_211 : i32 to index
    %c0_212 = arith.constant 0 : index
    %c0_213 = arith.constant 0 : index
    %391 = vector.load %arg10[%390, %c0_212, %c0_213] : memref<8x8x128xbf16, #tpu.memory_space<vmem>>, vector<1x8x128xbf16>
    %392 = vector.shape_cast %391 : vector<1x8x128xbf16> to vector<8x128xbf16>
    %393 = arith.extf %392 : vector<8x128xbf16> to vector<8x128xf32>
    %cst_214 = arith.constant dense<0.000000e+00> : vector<8x128xf32>
    %394 = tpu.matmul %386, %342, %cst_214 {dimension_numbers = #tpu.dot_dimension_numbers<[1], [0], [0], [1], [0, 0, 1, 1], [], []>} : vector<8x128xbf16>, vector<128x128xbf16>, vector<8x128xf32> -> vector<8x128xf32>
    %395 = arith.addf %393, %394 : vector<8x128xf32>
    %396 = math.tanh %395 : vector<8x128xf32>
    %397 = vector.broadcast %c3_i32_211 : i32 to vector<8x1xi32>
    %398 = arith.cmpi slt, %397, %0 : vector<8x1xi32>
    %399 = arith.extui %398 : vector<8x1xi1> to vector<8x1xi32>
    %400 = arith.sitofp %399 : vector<8x1xi32> to vector<8x1xf32>
    %401 = arith.truncf %396 : vector<8x128xf32> to vector<8x128xbf16>
    %402 = vector.broadcast %400 : vector<8x1xf32> to vector<8x128xf32>
    %403 = arith.mulf %396, %402 : vector<8x128xf32>
    %404 = arith.addf %389, %403 : vector<8x128xf32>
    %c4_i32_215 = arith.constant 4 : i32
    %405 = arith.index_cast %c4_i32_215 : i32 to index
    %c0_216 = arith.constant 0 : index
    %c0_217 = arith.constant 0 : index
    %406 = vector.load %arg10[%405, %c0_216, %c0_217] : memref<8x8x128xbf16, #tpu.memory_space<vmem>>, vector<1x8x128xbf16>
    %407 = vector.shape_cast %406 : vector<1x8x128xbf16> to vector<8x128xbf16>
    %408 = arith.extf %407 : vector<8x128xbf16> to vector<8x128xf32>
    %cst_218 = arith.constant dense<0.000000e+00> : vector<8x128xf32>
    %409 = tpu.matmul %401, %342, %cst_218 {dimension_numbers = #tpu.dot_dimension_numbers<[1], [0], [0], [1], [0, 0, 1, 1], [], []>} : vector<8x128xbf16>, vector<128x128xbf16>, vector<8x128xf32> -> vector<8x128xf32>
    %410 = arith.addf %408, %409 : vector<8x128xf32>
    %411 = math.tanh %410 : vector<8x128xf32>
    %412 = vector.broadcast %c4_i32_215 : i32 to vector<8x1xi32>
    %413 = arith.cmpi slt, %412, %0 : vector<8x1xi32>
    %414 = arith.extui %413 : vector<8x1xi1> to vector<8x1xi32>
    %415 = arith.sitofp %414 : vector<8x1xi32> to vector<8x1xf32>
    %416 = arith.truncf %411 : vector<8x128xf32> to vector<8x128xbf16>
    %417 = vector.broadcast %415 : vector<8x1xf32> to vector<8x128xf32>
    %418 = arith.mulf %411, %417 : vector<8x128xf32>
    %419 = arith.addf %404, %418 : vector<8x128xf32>
    %c5_i32_219 = arith.constant 5 : i32
    %420 = arith.index_cast %c5_i32_219 : i32 to index
    %c0_220 = arith.constant 0 : index
    %c0_221 = arith.constant 0 : index
    %421 = vector.load %arg10[%420, %c0_220, %c0_221] : memref<8x8x128xbf16, #tpu.memory_space<vmem>>, vector<1x8x128xbf16>
    %422 = vector.shape_cast %421 : vector<1x8x128xbf16> to vector<8x128xbf16>
    %423 = arith.extf %422 : vector<8x128xbf16> to vector<8x128xf32>
    %cst_222 = arith.constant dense<0.000000e+00> : vector<8x128xf32>
    %424 = tpu.matmul %416, %342, %cst_222 {dimension_numbers = #tpu.dot_dimension_numbers<[1], [0], [0], [1], [0, 0, 1, 1], [], []>} : vector<8x128xbf16>, vector<128x128xbf16>, vector<8x128xf32> -> vector<8x128xf32>
    %425 = arith.addf %423, %424 : vector<8x128xf32>
    %426 = math.tanh %425 : vector<8x128xf32>
    %427 = vector.broadcast %c5_i32_219 : i32 to vector<8x1xi32>
    %428 = arith.cmpi slt, %427, %0 : vector<8x1xi32>
    %429 = arith.extui %428 : vector<8x1xi1> to vector<8x1xi32>
    %430 = arith.sitofp %429 : vector<8x1xi32> to vector<8x1xf32>
    %431 = arith.truncf %426 : vector<8x128xf32> to vector<8x128xbf16>
    %432 = vector.broadcast %430 : vector<8x1xf32> to vector<8x128xf32>
    %433 = arith.mulf %426, %432 : vector<8x128xf32>
    %434 = arith.addf %419, %433 : vector<8x128xf32>
    %c6_i32_223 = arith.constant 6 : i32
    %435 = arith.index_cast %c6_i32_223 : i32 to index
    %c0_224 = arith.constant 0 : index
    %c0_225 = arith.constant 0 : index
    %436 = vector.load %arg10[%435, %c0_224, %c0_225] : memref<8x8x128xbf16, #tpu.memory_space<vmem>>, vector<1x8x128xbf16>
    %437 = vector.shape_cast %436 : vector<1x8x128xbf16> to vector<8x128xbf16>
    %438 = arith.extf %437 : vector<8x128xbf16> to vector<8x128xf32>
    %cst_226 = arith.constant dense<0.000000e+00> : vector<8x128xf32>
    %439 = tpu.matmul %431, %342, %cst_226 {dimension_numbers = #tpu.dot_dimension_numbers<[1], [0], [0], [1], [0, 0, 1, 1], [], []>} : vector<8x128xbf16>, vector<128x128xbf16>, vector<8x128xf32> -> vector<8x128xf32>
    %440 = arith.addf %438, %439 : vector<8x128xf32>
    %441 = math.tanh %440 : vector<8x128xf32>
    %442 = vector.broadcast %c6_i32_223 : i32 to vector<8x1xi32>
    %443 = arith.cmpi slt, %442, %0 : vector<8x1xi32>
    %444 = arith.extui %443 : vector<8x1xi1> to vector<8x1xi32>
    %445 = arith.sitofp %444 : vector<8x1xi32> to vector<8x1xf32>
    %446 = arith.truncf %441 : vector<8x128xf32> to vector<8x128xbf16>
    %447 = vector.broadcast %445 : vector<8x1xf32> to vector<8x128xf32>
    %448 = arith.mulf %441, %447 : vector<8x128xf32>
    %449 = arith.addf %434, %448 : vector<8x128xf32>
    %c7_i32_227 = arith.constant 7 : i32
    %450 = arith.index_cast %c7_i32_227 : i32 to index
    %c0_228 = arith.constant 0 : index
    %c0_229 = arith.constant 0 : index
    %451 = vector.load %arg10[%450, %c0_228, %c0_229] : memref<8x8x128xbf16, #tpu.memory_space<vmem>>, vector<1x8x128xbf16>
    %452 = vector.shape_cast %451 : vector<1x8x128xbf16> to vector<8x128xbf16>
    %453 = arith.extf %452 : vector<8x128xbf16> to vector<8x128xf32>
    %cst_230 = arith.constant dense<0.000000e+00> : vector<8x128xf32>
    %454 = tpu.matmul %446, %342, %cst_230 {dimension_numbers = #tpu.dot_dimension_numbers<[1], [0], [0], [1], [0, 0, 1, 1], [], []>} : vector<8x128xbf16>, vector<128x128xbf16>, vector<8x128xf32> -> vector<8x128xf32>
    %455 = arith.addf %453, %454 : vector<8x128xf32>
    %456 = math.tanh %455 : vector<8x128xf32>
    %457 = vector.broadcast %c7_i32_227 : i32 to vector<8x1xi32>
    %458 = arith.cmpi slt, %457, %0 : vector<8x1xi32>
    %459 = arith.extui %458 : vector<8x1xi1> to vector<8x1xi32>
    %460 = arith.sitofp %459 : vector<8x1xi32> to vector<8x1xf32>
    %461 = arith.truncf %456 : vector<8x128xf32> to vector<8x128xbf16>
    %462 = vector.broadcast %460 : vector<8x1xf32> to vector<8x128xf32>
    %463 = arith.mulf %456, %462 : vector<8x128xf32>
    %464 = arith.addf %449, %463 : vector<8x128xf32>
    %c8_i32_231 = arith.constant 8 : i32
    %cst_232 = arith.constant 1.250000e-01 : f32
    %465 = vector.broadcast %cst_232 : f32 to vector<8x128xf32>
    %466 = arith.mulf %464, %465 : vector<8x128xf32>
    %467 = arith.truncf %466 : vector<8x128xf32> to vector<8x128xbf16>
    %c0_233 = arith.constant 0 : index
    %c0_234 = arith.constant 0 : index
    %468 = vector.load %arg7[%c0_233, %c0_234] : memref<128x128xbf16, #tpu.memory_space<vmem>>, vector<128x128xbf16>
    %cst_235 = arith.constant dense<0.000000e+00> : vector<8x128xf32>
    %469 = tpu.matmul %467, %468, %cst_235 {dimension_numbers = #tpu.dot_dimension_numbers<[1], [0], [0], [1], [0, 0, 1, 1], [], []>} : vector<8x128xbf16>, vector<128x128xbf16>, vector<8x128xf32> -> vector<8x128xf32>
    %c0_236 = arith.constant 0 : index
    %c0_237 = arith.constant 0 : index
    %470 = vector.load %arg8[%c0_236, %c0_237] : memref<1x128xf32, #tpu.memory_space<vmem>>, vector<1x128xf32>
    %471 = vector.broadcast %470 : vector<1x128xf32> to vector<8x128xf32>
    %472 = arith.addf %469, %471 : vector<8x128xf32>
    %c0_238 = arith.constant 0 : index
    %c0_239 = arith.constant 0 : index
    %473 = vector.load %arg9[%c0_238, %c0_239] : memref<8x128xf32, #tpu.memory_space<vmem>>, vector<8x128xf32>
    tpu.vector_store %arg9[%c0_238, %c0_239], %472 {strides = array<i32>} : memref<8x128xf32, #tpu.memory_space<vmem>>, vector<8x128xf32>,
    return
  }
  func.func @transform_0(%arg0: i32) -> (i32, i32, i32) {
    %c0_i32 = arith.constant 0 : i32
    %c0_i32_0 = arith.constant 0 : i32
    %c0_i32_1 = arith.constant 0 : i32
    return %c0_i32, %arg0, %c0_i32_0 : i32, i32, i32
  }
  func.func @transform_1(%arg0: i32) -> (i32, i32) {
    %c0_i32 = arith.constant 0 : i32
    %c0_i32_0 = arith.constant 0 : i32
    return %arg0, %c0_i32 : i32, i32
  }
  func.func @transform_2(%arg0: i32) -> (i32, i32) {
    %c0_i32 = arith.constant 0 : i32
    %c0_i32_0 = arith.constant 0 : i32
    %c0_i32_1 = arith.constant 0 : i32
    return %c0_i32, %c0_i32_0 : i32, i32
  }
  func.func @transform_3(%arg0: i32) -> (i32, i32, i32) {
    %c0_i32 = arith.constant 0 : i32
    %c0_i32_0 = arith.constant 0 : i32
    %c0_i32_1 = arith.constant 0 : i32
    %c0_i32_2 = arith.constant 0 : i32
    return %c0_i32, %c0_i32_0, %c0_i32_1 : i32, i32, i32
  }
  func.func @transform_4(%arg0: i32) -> (i32, i32, i32) {
    %c0_i32 = arith.constant 0 : i32
    %c0_i32_0 = arith.constant 0 : i32
    %c0_i32_1 = arith.constant 0 : i32
    %c0_i32_2 = arith.constant 0 : i32
    return %c0_i32, %c0_i32_0, %c0_i32_1 : i32, i32, i32
  }
  func.func @transform_5(%arg0: i32) -> (i32, i32) {
    %c0_i32 = arith.constant 0 : i32
    %c0_i32_0 = arith.constant 0 : i32
    %c0_i32_1 = arith.constant 0 : i32
    return %c0_i32, %c0_i32_0 : i32, i32
  }
  func.func @transform_6(%arg0: i32) -> (i32, i32) {
    %c0_i32 = arith.constant 0 : i32
    %c0_i32_0 = arith.constant 0 : i32
    %c0_i32_1 = arith.constant 0 : i32
    return %c0_i32, %c0_i32_0 : i32, i32
  }
  func.func @transform_7(%arg0: i32) -> (i32, i32) {
    %c0_i32 = arith.constant 0 : i32
    %c0_i32_0 = arith.constant 0 : i32
    %c0_i32_1 = arith.constant 0 : i32
    return %c0_i32, %c0_i32_0 : i32, i32
  }
  func.func @transform_8(%arg0: i32) -> (i32, i32) {
    %c0_i32 = arith.constant 0 : i32
    %c0_i32_0 = arith.constant 0 : i32
    return %arg0, %c0_i32 : i32, i32
  }
}

</mosaic_0001>

<llo_original>
// kernel: word_classifier_forward.1
$region0: #{word_classifier_forward.1}
  #allocation0 [shape = 'u32[]', space=smem, size = 0x4, offset = 0x4, fixed_abs, tag = 'smem constant byte address 0x4 - core index']
  #allocation1 [shape = 'u32[72,128]{1,0:T(1,128)}', space=vmem, size = 0x9000, scoped, tag = 'internal scratch']
  #allocation2 [shape = 'bf16[8,8,128]{2,1,0:T(8,128)(2,1)}', space=vmem, size = 0x4000, scoped, tag = 'scratch operand']
  %s0 = inlined_call_operand.vmem [shape: bf16[8,8,32], index: 0, kind: input, shape index: {}]
  %s1 = inlined_call_operand.vmem [shape: s32[8,1], index: 1, kind: input, shape index: {}]
  %s2 = inlined_call_operand.vmem [shape: bf16[32,128], index: 2, kind: input, shape index: {}]
  %s3 = inlined_call_operand.vmem [shape: bf16[3,128,128], index: 3, kind: input, shape index: {}]
  %s4 = inlined_call_operand.vmem [shape: bf16[4,128,128], index: 4, kind: input, shape index: {}]
  %s5 = inlined_call_operand.vmem [shape: f32[4,128], index: 5, kind: input, shape index: {}]
  %s6 = inlined_call_operand.vmem [shape: bf16[128,128], index: 6, kind: input, shape index: {}]
  %s7 = inlined_call_operand.vmem [shape: f32[1,128], index: 7, kind: input, shape index: {}]
  %s8 = inlined_call_operand.vmem [shape: f32[8,128], index: 8, kind: output, shape index: {}]
  %s9 = sld [smem:[#allocation0]]
  $region42: #{word_classifier_forward.1} parent=0
    _
  %s11 = ssub.s32 1, %s9
  %s12 = scalar_select 0, %s11, %s9
  // Predicated region
  $region2: #{word_classifier_forward.1} parent=0 // pred_check
    _
  $region3: #{word_classifier_forward.1} parent=0 // pred_check_branch
    %14 = sbr.rel (0) target = $region5
  $region4: #{word_classifier_forward.1} parent=0 // pred_region
    _
  $region5: #{word_classifier_forward.1} parent=0 // pred_fallthru
    _
  // Predicated region
  $region6: #{word_classifier_forward.1} parent=0 // pred_check
    _
  $region7: #{word_classifier_forward.1} parent=0 // pred_check_branch
    %16 = sbr.rel (0) target = $region9
  $region8: #{word_classifier_forward.1} parent=0 // pred_region
    _
  $region9: #{word_classifier_forward.1} parent=0 // pred_fallthru
    _
  // Predicated region
  $region10: #{word_classifier_forward.1} parent=0 // pred_check
    _
  $region11: #{word_classifier_forward.1} parent=0 // pred_check_branch
    %18 = sbr.rel (0) target = $region13
  $region12: #{word_classifier_forward.1} parent=0 // pred_region
    _
  $region13: #{word_classifier_forward.1} parent=0 // pred_fallthru
    _
  // Predicated region
  $region14: #{word_classifier_forward.1} parent=0 // pred_check
    _
  $region15: #{word_classifier_forward.1} parent=0 // pred_check_branch
    %20 = sbr.rel (0) target = $region17
  $region16: #{word_classifier_forward.1} parent=0 // pred_region
    _
  $region17: #{word_classifier_forward.1} parent=0 // pred_fallthru
    _
  // Predicated region
  $region18: #{word_classifier_forward.1} parent=0 // pred_check
    _
  $region19: #{word_classifier_forward.1} parent=0 // pred_check_branch
    %22 = sbr.rel (0) target = $region21
  $region20: #{word_classifier_forward.1} parent=0 // pred_region
    _
  $region21: #{word_classifier_forward.1} parent=0 // pred_fallthru
    _
  // Predicated region
  $region22: #{word_classifier_forward.1} parent=0 // pred_check
    _
  $region23: #{word_classifier_forward.1} parent=0 // pred_check_branch
    %24 = sbr.rel (0) target = $region25
  $region24: #{word_classifier_forward.1} parent=0 // pred_region
    _
  $region25: #{word_classifier_forward.1} parent=0 // pred_fallthru
    _
  // Predicated region
  $region26: #{word_classifier_forward.1} parent=0 // pred_check
    _
  $region27: #{word_classifier_forward.1} parent=0 // pred_check_branch
    %26 = sbr.rel (0) target = $region29
  $region28: #{word_classifier_forward.1} parent=0 // pred_region
    _
  $region29: #{word_classifier_forward.1} parent=0 // pred_fallthru
    _
  // Predicated region
  $region30: #{word_classifier_forward.1} parent=0 // pred_check
    _
  $region31: #{word_classifier_forward.1} parent=0 // pred_check_branch
    %28 = sbr.rel (0) target = $region33
  $region32: #{word_classifier_forward.1} parent=0 // pred_region
    _
  $region33: #{word_classifier_forward.1} parent=0 // pred_fallthru
    _
  %v30 = vld [vmem:[%s1] sm:$0xff]
  %v31 = vld [vmem:[%s2] sm:$0xf]
  %v32 = vld [vmem:[%s2 + $0x4] sm:$0xf]
  %v33 = vld [vmem:[%s2 + $0x8] sm:$0xf]
  %v34 = vld [vmem:[%s2 + $0xc] sm:$0xf]
  %v35 = vld [vmem:[%s5] sm:$0x1]
  %v36 = vld [vmem:[%s0] sm:$0xf]
  %v37 = vld [vmem:[%s0 + $0x4] sm:$0xf]
  %v38 = vld [vmem:[%s0 + $0x8] sm:$0xf]
  %v39 = vld [vmem:[%s0 + $0xc] sm:$0xf]
  %v40 = vld [vmem:[%s0 + $0x10] sm:$0xf]
  %v41 = vld [vmem:[%s0 + $0x14] sm:$0xf]
  %v42 = vld [vmem:[%s0 + $0x18] sm:$0xf]
  %v43 = vld [vmem:[%s0 + $0x1c] sm:$0xf]
  %v44 = vperm.slane %v35, 0
  %v53 = vunpack.c.l.b16 %v36
  %v54 = vunpack.c.l.b16 %v37
  %v55 = vunpack.c.l.b16 %v38
  %v56 = vunpack.c.l.b16 %v39
  %v57 = vunpack.c.l.b16 %v40
  %v58 = vunpack.c.l.b16 %v41
  %v59 = vunpack.c.l.b16 %v42
  %v60 = vunpack.c.l.b16 %v43
  %v61 = vpack.c.b16 %v54, %v53
  %v62 = vpack.c.b16 %v56, %v55
  %v63 = vpack.c.b16 %v58, %v57
  %v64 = vpack.c.b16 %v60, %v59
  %v69 = vunpack.c.l.b16 %v31
  %v70 = vunpack.c.l.b16 %v32
  %v71 = vunpack.c.l.b16 %v33
  %v72 = vunpack.c.l.b16 %v34
  %v73 = vpack.c.b16 %v70, %v69
  %v74 = vpack.c.b16 %v72, %v71
  %vm77 = vcmask 261120
  %v79 = vsel %vm77, %v61, 0
  %v82 = vsel %vm77, %v62, 0
  %v85 = vsel %vm77, %v63, 0
  %v88 = vsel %vm77, %v64, 0
  %90 = vmatpush.bf16.msra.mxu0 0
  %91 = vmatpush.bf16.msra.mxu0 0
  %92 = vmatpush.bf16.msra.mxu0 0
  %93 = vmatpush.bf16.msra.mxu0 0
  %94 = vmatpush.bf16.msra.mxu0 0
  %95 = vmatpush.bf16.msra.mxu0 0
  %96 = vmatpush.bf16.msra.mxu0 %v74
  %97 = vmatpush.bf16.msra.mxu0 %v73
  %98 = vmatmul.bf16.gmra.mxu0 %v79
  %v99 = vpop.f32.mrf.mxu0
  %v100 = vadd.f32 %v44, %v99
  %v101 = vpop.f32.mrf.mxu0
  %v102 = vadd.f32 %v44, %v101
  %103 = vmatmul.bf16.gmra.mxu0 %v82
  %v104 = vpop.f32.mrf.mxu0
  %v105 = vadd.f32 %v44, %v104
  %v106 = vpop.f32.mrf.mxu0
  %v107 = vadd.f32 %v44, %v106
  %108 = vmatmul.bf16.gmra.mxu0 %v85
  %v109 = vpop.f32.mrf.mxu0
  %v110 = vadd.f32 %v44, %v109
  %v111 = vpop.f32.mrf.mxu0
  %v112 = vadd.f32 %v44, %v111
  %113 = vmatmul.bf16.gmra.mxu0 %v88
  %v114 = vpop.f32.mrf.mxu0
  %v115 = vadd.f32 %v44, %v114
  %v116 = vpop.f32.mrf.mxu0
  %v117 = vadd.f32 %v44, %v116
  %118 = vdwg.mxu0
  %v119 = vpack.c.bf16 %v100, %v100
  %v120 = vpack.c.bf16 %v102, %v102
  %v121 = vpack.c.bf16 %v105, %v105
  %v122 = vpack.c.bf16 %v107, %v107
  %v123 = vpack.c.bf16 %v110, %v110
  %v124 = vpack.c.bf16 %v112, %v112
  %v125 = vpack.c.bf16 %v115, %v115
  %v126 = vpack.c.bf16 %v117, %v117
  %127 = vst [vmem:[#allocation2] sm:$0xf] %v119
  %128 = vst [vmem:[#allocation2 + $0x4] sm:$0xf] %v120
  %129 = vst [vmem:[#allocation2 + $0x8] sm:$0xf] %v121
  %130 = vst [vmem:[#allocation2 + $0xc] sm:$0xf] %v122
  %131 = vst [vmem:[#allocation2 + $0x10] sm:$0xf] %v123
  %132 = vst [vmem:[#allocation2 + $0x14] sm:$0xf] %v124
  %133 = vst [vmem:[#allocation2 + $0x18] sm:$0xf] %v125
  %134 = vst [vmem:[#allocation2 + $0x1c] sm:$0xf] %v126
  %v135 = vld [vmem:[%s4] sm:$0xf]
  %v136 = vld [vmem:[%s4 + $0x4] sm:$0xf]
  %v137 = vld [vmem:[%s4 + $0x8] sm:$0xf]
  %v138 = vld [vmem:[%s4 + $0xc] sm:$0xf]
  %v139 = vld [vmem:[%s4 + $0x10] sm:$0xf]
  %v140 = vld [vmem:[%s4 + $0x14] sm:$0xf]
  %v141 = vld [vmem:[%s4 + $0x18] sm:$0xf]
  %v142 = vld [vmem:[%s4 + $0x1c] sm:$0xf]
  %v143 = vld [vmem:[%s4 + $0x20] sm:$0xf]
  %v144 = vld [vmem:[%s4 + $0x24] sm:$0xf]
  %v145 = vld [vmem:[%s4 + $0x28] sm:$0xf]
  %v146 = vld [vmem:[%s4 + $0x2c] sm:$0xf]
  %v147 = vld [vmem:[%s4 + $0x30] sm:$0xf]
  %v148 = vld [vmem:[%s4 + $0x34] sm:$0xf]
  %v149 = vld [vmem:[%s4 + $0x38] sm:$0xf]
  %v150 = vld [vmem:[%s4 + $0x3c] sm:$0xf]
  %v151 = vld [vmem:[#allocation2] sm:$0xf]
  %v152 = vunpack.c.l.bf16 %v151
  %v169 = vunpack.c.l.b16 %v135
  %v170 = vunpack.c.l.b16 %v136
  %v171 = vunpack.c.l.b16 %v137
  %v172 = vunpack.c.l.b16 %v138
  %v173 = vunpack.c.l.b16 %v139
  %v174 = vunpack.c.l.b16 %v140
  %v175 = vunpack.c.l.b16 %v141
  %v176 = vunpack.c.l.b16 %v142
  %v177 = vunpack.c.l.b16 %v143
  %v178 = vunpack.c.l.b16 %v144
  %v179 = vunpack.c.l.b16 %v145
  %v180 = vunpack.c.l.b16 %v146
  %v181 = vunpack.c.l.b16 %v147
  %v182 = vunpack.c.l.b16 %v148
  %v183 = vunpack.c.l.b16 %v149
  %v184 = vunpack.c.l.b16 %v150
  %v185 = vpack.c.b16 %v170, %v169
  %v186 = vpack.c.b16 %v172, %v171
  %v187 = vpack.c.b16 %v174, %v173
  %v188 = vpack.c.b16 %v176, %v175
  %v189 = vpack.c.b16 %v178, %v177
  %v190 = vpack.c.b16 %v180, %v179
  %v191 = vpack.c.b16 %v182, %v181
  %v192 = vpack.c.b16 %v184, %v183
  %201 = vmatpush.bf16.msra.mxu0 %v192
  %202 = vmatpush.bf16.msra.mxu0 %v191
  %203 = vmatpush.bf16.msra.mxu0 %v190
  %204 = vmatpush.bf16.msra.mxu0 %v189
  %205 = vmatpush.bf16.msra.mxu0 %v188
  %206 = vmatpush.bf16.msra.mxu0 %v187
  %207 = vmatpush.bf16.msra.mxu0 %v186
  %208 = vmatpush.bf16.msra.mxu0 %v185
  %209 = vmatmul.bf16.gmra.mxu0 0
  %v210 = vpop.f32.mrf.mxu0
  %v211 = vadd.f32 0.0, %v210
  %v212 = vpop.f32.mrf.mxu0
  %213 = vdwg.mxu0
  %v214 = vadd.f32 %v152, %v211
  %v215 = vtanh.pop %v214
  %v216 = vpack.c.bf16 %v215, %v215
  %217 = vst [vmem:[#allocation2] sm:$0xf] %v216
  %s218 = scalar_lea.vmem [#allocation2], 4
  %v219 = vld [vmem:[%s218] sm:$0xf]
  %v220 = vunpack.c.l.bf16 %v219
  %221 = vmatpush.bf16.msra.mxu0 %v192
  %222 = vmatpush.bf16.msra.mxu0 %v191
  %223 = vmatpush.bf16.msra.mxu0 %v190
  %224 = vmatpush.bf16.msra.mxu0 %v189
  %225 = vmatpush.bf16.msra.mxu0 %v188
  %226 = vmatpush.bf16.msra.mxu0 %v187
  %227 = vmatpush.bf16.msra.mxu0 %v186
  %228 = vmatpush.bf16.msra.mxu0 %v185
  %229 = vmatmul.bf16.gmra.mxu0 %v216
  %v230 = vpop.f32.mrf.mxu0
  %v231 = vadd.f32 0.0, %v230
  %v232 = vpop.f32.mrf.mxu0
  %233 = vdwg.mxu0
  %v234 = vadd.f32 %v220, %v231
  %v235 = vtanh.pop %v234
  %v236 = vpack.c.bf16 %v235, %v235
  %237 = vst [vmem:[%s218] sm:$0xf] %v236
  %s238 = scalar_lea.vmem [#allocation2], 8
  %v239 = vld [vmem:[%s238] sm:$0xf]
  %v240 = vunpack.c.l.bf16 %v239
  %241 = vmatpush.bf16.msra.mxu0 %v192
  %242 = vmatpush.bf16.msra.mxu0 %v191
  %243 = vmatpush.bf16.msra.mxu0 %v190
  %244 = vmatpush.bf16.msra.mxu0 %v189
  %245 = vmatpush.bf16.msra.mxu0 %v188
  %246 = vmatpush.bf16.msra.mxu0 %v187
  %247 = vmatpush.bf16.msra.mxu0 %v186
  %248 = vmatpush.bf16.msra.mxu0 %v185
  %249 = vmatmul.bf16.gmra.mxu0 %v236
  %v250 = vpop.f32.mrf.mxu0
  %v251 = vadd.f32 0.0, %v250
  %v252 = vpop.f32.mrf.mxu0
  %253 = vdwg.mxu0
  %v254 = vadd.f32 %v240, %v251
  %v255 = vtanh.pop %v254
  %v256 = vpack.c.bf16 %v255, %v255
  %257 = vst [vmem:[%s238] sm:$0xf] %v256
  %s258 = scalar_lea.vmem [#allocation2], 12
  %v259 = vld [vmem:[%s258] sm:$0xf]
  %v260 = vunpack.c.l.bf16 %v259
  %261 = vmatpush.bf16.msra.mxu0 %v192
  %262 = vmatpush.bf16.msra.mxu0 %v191
  %263 = vmatpush.bf16.msra.mxu0 %v190
  %264 = vmatpush.bf16.msra.mxu0 %v189
  %265 = vmatpush.bf16.msra.mxu0 %v188
  %266 = vmatpush.bf16.msra.mxu0 %v187
  %267 = vmatpush.bf16.msra.mxu0 %v186
  %268 = vmatpush.bf16.msra.mxu0 %v185
  %269 = vmatmul.bf16.gmra.mxu0 %v256
  %v270 = vpop.f32.mrf.mxu0
  %v271 = vadd.f32 0.0, %v270
  %v272 = vpop.f32.mrf.mxu0
  %273 = vdwg.mxu0
  %v274 = vadd.f32 %v260, %v271
  %v275 = vtanh.pop %v274
  %v276 = vpack.c.bf16 %v275, %v275
  %277 = vst [vmem:[%s258] sm:$0xf] %v276
  %s278 = scalar_lea.vmem [#allocation2], 16
  %v279 = vld [vmem:[%s278] sm:$0xf]
  %v280 = vunpack.c.l.bf16 %v279
  %281 = vmatpush.bf16.msra.mxu0 %v192
  %282 = vmatpush.bf16.msra.mxu0 %v191
  %283 = vmatpush.bf16.msra.mxu0 %v190
  %284 = vmatpush.bf16.msra.mxu0 %v189
  %285 = vmatpush.bf16.msra.mxu0 %v188
  %286 = vmatpush.bf16.msra.mxu0 %v187
  %287 = vmatpush.bf16.msra.mxu0 %v186
  %288 = vmatpush.bf16.msra.mxu0 %v185
  %289 = vmatmul.bf16.gmra.mxu0 %v276
  %v290 = vpop.f32.mrf.mxu0
  %v291 = vadd.f32 0.0, %v290
  %v292 = vpop.f32.mrf.mxu0
  %293 = vdwg.mxu0
  %v294 = vadd.f32 %v280, %v291
  %v295 = vtanh.pop %v294
  %v296 = vpack.c.bf16 %v295, %v295
  %297 = vst [vmem:[%s278] sm:$0xf] %v296
  %s298 = scalar_lea.vmem [#allocation2], 20
  %v299 = vld [vmem:[%s298] sm:$0xf]
  %v300 = vunpack.c.l.bf16 %v299
  %301 = vmatpush.bf16.msra.mxu0 %v192
  %302 = vmatpush.bf16.msra.mxu0 %v191
  %303 = vmatpush.bf16.msra.mxu0 %v190
  %304 = vmatpush.bf16.msra.mxu0 %v189
  %305 = vmatpush.bf16.msra.mxu0 %v188
  %306 = vmatpush.bf16.msra.mxu0 %v187
  %307 = vmatpush.bf16.msra.mxu0 %v186
  %308 = vmatpush.bf16.msra.mxu0 %v185
  %309 = vmatmul.bf16.gmra.mxu0 %v296
  %v310 = vpop.f32.mrf.mxu0
  %v311 = vadd.f32 0.0, %v310
  %v312 = vpop.f32.mrf.mxu0
  %313 = vdwg.mxu0
  %v314 = vadd.f32 %v300, %v311
  %v315 = vtanh.pop %v314
  %v316 = vpack.c.bf16 %v315, %v315
  %317 = vst [vmem:[%s298] sm:$0xf] %v316
  %s318 = scalar_lea.vmem [#allocation2], 24
  %v319 = vld [vmem:[%s318] sm:$0xf]
  %v320 = vunpack.c.l.bf16 %v319
  %321 = vmatpush.bf16.msra.mxu0 %v192
  %322 = vmatpush.bf16.msra.mxu0 %v191
  %323 = vmatpush.bf16.msra.mxu0 %v190
  %324 = vmatpush.bf16.msra.mxu0 %v189
  %325 = vmatpush.bf16.msra.mxu0 %v188
  %326 = vmatpush.bf16.msra.mxu0 %v187
  %327 = vmatpush.bf16.msra.mxu0 %v186
  %328 = vmatpush.bf16.msra.mxu0 %v185
  %329 = vmatmul.bf16.gmra.mxu0 %v316
  %v330 = vpop.f32.mrf.mxu0
  %v331 = vadd.f32 0.0, %v330
  %v332 = vpop.f32.mrf.mxu0
  %333 = vdwg.mxu0
  %v334 = vadd.f32 %v320, %v331
  %v335 = vtanh.pop %v334
  %v336 = vpack.c.bf16 %v335, %v335
  %337 = vst [vmem:[%s318] sm:$0xf] %v336
  %s338 = scalar_lea.vmem [#allocation2], 28
  %v339 = vld [vmem:[%s338] sm:$0xf]
  %v340 = vunpack.c.l.bf16 %v339
  %341 = vmatpush.bf16.msra.mxu0 %v192
  %342 = vmatpush.bf16.msra.mxu0 %v191
  %343 = vmatpush.bf16.msra.mxu0 %v190
  %344 = vmatpush.bf16.msra.mxu0 %v189
  %345 = vmatpush.bf16.msra.mxu0 %v188
  %346 = vmatpush.bf16.msra.mxu0 %v187
  %347 = vmatpush.bf16.msra.mxu0 %v186
  %348 = vmatpush.bf16.msra.mxu0 %v185
  %349 = vmatmul.bf16.gmra.mxu0 %v336
  %v350 = vpop.f32.mrf.mxu0
  %v351 = vadd.f32 0.0, %v350
  %v352 = vpop.f32.mrf.mxu0
  %353 = vdwg.mxu0
  %v354 = vadd.f32 %v340, %v351
  %v355 = vtanh.pop %v354
  %v356 = vpack.c.bf16 %v355, %v355
  %357 = vst [vmem:[%s338] sm:$0xf] %v356
  %v358 = vld [vmem:[%s3] sm:$0xf]
  %v359 = vld [vmem:[%s3 + $0x4] sm:$0xf]
  %v360 = vld [vmem:[%s3 + $0x8] sm:$0xf]
  %v361 = vld [vmem:[%s3 + $0xc] sm:$0xf]
  %v362 = vld [vmem:[%s3 + $0x10] sm:$0xf]
  %v363 = vld [vmem:[%s3 + $0x14] sm:$0xf]
  %v364 = vld [vmem:[%s3 + $0x18] sm:$0xf]
  %v365 = vld [vmem:[%s3 + $0x1c] sm:$0xf]
  %v366 = vld [vmem:[%s3 + $0x20] sm:$0xf]
  %v367 = vld [vmem:[%s3 + $0x24] sm:$0xf]
  %v368 = vld [vmem:[%s3 + $0x28] sm:$0xf]
  %v369 = vld [vmem:[%s3 + $0x2c] sm:$0xf]
  %v370 = vld [vmem:[%s3 + $0x30] sm:$0xf]
  %v371 = vld [vmem:[%s3 + $0x34] sm:$0xf]
  %v372 = vld [vmem:[%s3 + $0x38] sm:$0xf]
  %v373 = vld [vmem:[%s3 + $0x3c] sm:$0xf]
  %v374 = vld [vmem:[%s5 + $0x1] sm:$0x1]
  %v375 = vld [vmem:[#allocation2] sm:$0xf]
  %v376 = vld [vmem:[#allocation2 + $0x4] sm:$0xf]
  %v377 = vld [vmem:[#allocation2 + $0x8] sm:$0xf]
  %v378 = vld [vmem:[#allocation2 + $0xc] sm:$0xf]
  %v379 = vld [vmem:[#allocation2 + $0x10] sm:$0xf]
  %v380 = vld [vmem:[#allocation2 + $0x14] sm:$0xf]
  %v381 = vld [vmem:[#allocation2 + $0x18] sm:$0xf]
  %v382 = vld [vmem:[#allocation2 + $0x1c] sm:$0xf]
  %v383 = vperm.slane %v374, 0
  %v392 = vunpack.c.l.b16 %v375
  %v393 = vunpack.c.l.b16 %v376
  %v394 = vunpack.c.l.b16 %v377
  %v395 = vunpack.c.l.b16 %v378
  %v396 = vunpack.c.l.b16 %v379
  %v397 = vunpack.c.l.b16 %v380
  %v398 = vunpack.c.l.b16 %v381
  %v399 = vunpack.c.l.b16 %v382
  %v400 = vpack.c.b16 %v393, %v392
  %v401 = vpack.c.b16 %v395, %v394
  %v402 = vpack.c.b16 %v397, %v396
  %v403 = vpack.c.b16 %v399, %v398
  %v424 = vunpack.c.l.b16 %v358
  %v425 = vunpack.c.l.b16 %v359
  %v426 = vunpack.c.l.b16 %v360
  %v427 = vunpack.c.l.b16 %v361
  %v428 = vunpack.c.l.b16 %v362
  %v429 = vunpack.c.l.b16 %v363
  %v430 = vunpack.c.l.b16 %v364
  %v431 = vunpack.c.l.b16 %v365
  %v432 = vunpack.c.l.b16 %v366
  %v433 = vunpack.c.l.b16 %v367
  %v434 = vunpack.c.l.b16 %v368
  %v435 = vunpack.c.l.b16 %v369
  %v436 = vunpack.c.l.b16 %v370
  %v437 = vunpack.c.l.b16 %v371
  %v438 = vunpack.c.l.b16 %v372
  %v439 = vunpack.c.l.b16 %v373
  %v440 = vpack.c.b16 %v425, %v424
  %v441 = vpack.c.b16 %v427, %v426
  %v442 = vpack.c.b16 %v429, %v428
  %v443 = vpack.c.b16 %v431, %v430
  %v444 = vpack.c.b16 %v433, %v432
  %v445 = vpack.c.b16 %v435, %v434
  %v446 = vpack.c.b16 %v437, %v436
  %v447 = vpack.c.b16 %v439, %v438
  %456 = vmatpush.bf16.msra.mxu0 %v447
  %457 = vmatpush.bf16.msra.mxu0 %v446
  %458 = vmatpush.bf16.msra.mxu0 %v445
  %459 = vmatpush.bf16.msra.mxu0 %v444
  %460 = vmatpush.bf16.msra.mxu0 %v443
  %461 = vmatpush.bf16.msra.mxu0 %v442
  %462 = vmatpush.bf16.msra.mxu0 %v441
  %463 = vmatpush.bf16.msra.mxu0 %v440
  %464 = vmatmul.bf16.gmra.mxu0 %v400
  %v465 = vpop.f32.mrf.mxu0
  %v466 = vadd.f32 %v383, %v465
  %v467 = vpop.f32.mrf.mxu0
  %v468 = vadd.f32 %v383, %v467
  %469 = vmatmul.bf16.gmra.mxu0 %v401
  %v470 = vpop.f32.mrf.mxu0
  %v471 = vadd.f32 %v383, %v470
  %v472 = vpop.f32.mrf.mxu0
  %v473 = vadd.f32 %v383, %v472
  %474 = vmatmul.bf16.gmra.mxu0 %v402
  %v475 = vpop.f32.mrf.mxu0
  %v476 = vadd.f32 %v383, %v475
  %v477 = vpop.f32.mrf.mxu0
  %v478 = vadd.f32 %v383, %v477
  %479 = vmatmul.bf16.gmra.mxu0 %v403
  %v480 = vpop.f32.mrf.mxu0
  %v481 = vadd.f32 %v383, %v480
  %v482 = vpop.f32.mrf.mxu0
  %v483 = vadd.f32 %v383, %v482
  %484 = vdwg.mxu0
  %v485 = vpack.c.bf16 %v466, %v466
  %v486 = vpack.c.bf16 %v468, %v468
  %v487 = vpack.c.bf16 %v471, %v471
  %v488 = vpack.c.bf16 %v473, %v473
  %v489 = vpack.c.bf16 %v476, %v476
  %v490 = vpack.c.bf16 %v478, %v478
  %v491 = vpack.c.bf16 %v481, %v481
  %v492 = vpack.c.bf16 %v483, %v483
  %493 = vst [vmem:[#allocation2] sm:$0xf] %v485
  %494 = vst [vmem:[#allocation2 + $0x4] sm:$0xf] %v486
  %495 = vst [vmem:[#allocation2 + $0x8] sm:$0xf] %v487
  %496 = vst [vmem:[#allocation2 + $0xc] sm:$0xf] %v488
  %497 = vst [vmem:[#allocation2 + $0x10] sm:$0xf] %v489
  %498 = vst [vmem:[#allocation2 + $0x14] sm:$0xf] %v490
  %499 = vst [vmem:[#allocation2 + $0x18] sm:$0xf] %v491
  %500 = vst [vmem:[#allocation2 + $0x1c] sm:$0xf] %v492
  %s501 = scalar_lea.vmem %s4, 64
  %v502 = vld [vmem:[%s501] sm:$0xf]
  %v503 = vld [vmem:[%s501 + $0x4] sm:$0xf]
  %v504 = vld [vmem:[%s501 + $0x8] sm:$0xf]
  %v505 = vld [vmem:[%s501 + $0xc] sm:$0xf]
  %v506 = vld [vmem:[%s501 + $0x10] sm:$0xf]
  %v507 = vld [vmem:[%s501 + $0x14] sm:$0xf]
  %v508 = vld [vmem:[%s501 + $0x18] sm:$0xf]
  %v509 = vld [vmem:[%s501 + $0x1c] sm:$0xf]
  %v510 = vld [vmem:[%s501 + $0x20] sm:$0xf]
  %v511 = vld [vmem:[%s501 + $0x24] sm:$0xf]
  %v512 = vld [vmem:[%s501 + $0x28] sm:$0xf]
  %v513 = vld [vmem:[%s501 + $0x2c] sm:$0xf]
  %v514 = vld [vmem:[%s501 + $0x30] sm:$0xf]
  %v515 = vld [vmem:[%s501 + $0x34] sm:$0xf]
  %v516 = vld [vmem:[%s501 + $0x38] sm:$0xf]
  %v517 = vld [vmem:[%s501 + $0x3c] sm:$0xf]
  %v518 = vld [vmem:[#allocation2] sm:$0xf]
  %v519 = vunpack.c.l.bf16 %v518
  %v536 = vunpack.c.l.b16 %v502
  %v537 = vunpack.c.l.b16 %v503
  %v538 = vunpack.c.l.b16 %v504
  %v539 = vunpack.c.l.b16 %v505
  %v540 = vunpack.c.l.b16 %v506
  %v541 = vunpack.c.l.b16 %v507
  %v542 = vunpack.c.l.b16 %v508
  %v543 = vunpack.c.l.b16 %v509
  %v544 = vunpack.c.l.b16 %v510
  %v545 = vunpack.c.l.b16 %v511
  %v546 = vunpack.c.l.b16 %v512
  %v547 = vunpack.c.l.b16 %v513
  %v548 = vunpack.c.l.b16 %v514
  %v549 = vunpack.c.l.b16 %v515
  %v550 = vunpack.c.l.b16 %v516
  %v551 = vunpack.c.l.b16 %v517
  %v552 = vpack.c.b16 %v537, %v536
  %v553 = vpack.c.b16 %v539, %v538
  %v554 = vpack.c.b16 %v541, %v540
  %v555 = vpack.c.b16 %v543, %v542
  %v556 = vpack.c.b16 %v545, %v544
  %v557 = vpack.c.b16 %v547, %v546
  %v558 = vpack.c.b16 %v549, %v548
  %v559 = vpack.c.b16 %v551, %v550
  %568 = vmatpush.bf16.msra.mxu0 %v559
  %569 = vmatpush.bf16.msra.mxu0 %v558
  %570 = vmatpush.bf16.msra.mxu0 %v557
  %571 = vmatpush.bf16.msra.mxu0 %v556
  %572 = vmatpush.bf16.msra.mxu0 %v555
  %573 = vmatpush.bf16.msra.mxu0 %v554
  %574 = vmatpush.bf16.msra.mxu0 %v553
  %575 = vmatpush.bf16.msra.mxu0 %v552
  %576 = vmatmul.bf16.gmra.mxu0 0
  %v577 = vpop.f32.mrf.mxu0
  %v578 = vadd.f32 0.0, %v577
  %v579 = vpop.f32.mrf.mxu0
  %580 = vdwg.mxu0
  %v581 = vadd.f32 %v519, %v578
  %v582 = vtanh.pop %v581
  %v583 = vpack.c.bf16 %v582, %v582
  %584 = vst [vmem:[#allocation2] sm:$0xf] %v583
  %v585 = vld [vmem:[%s218] sm:$0xf]
  %v586 = vunpack.c.l.bf16 %v585
  %587 = vmatpush.bf16.msra.mxu0 %v559
  %588 = vmatpush.bf16.msra.mxu0 %v558
  %589 = vmatpush.bf16.msra.mxu0 %v557
  %590 = vmatpush.bf16.msra.mxu0 %v556
  %591 = vmatpush.bf16.msra.mxu0 %v555
  %592 = vmatpush.bf16.msra.mxu0 %v554
  %593 = vmatpush.bf16.msra.mxu0 %v553
  %594 = vmatpush.bf16.msra.mxu0 %v552
  %595 = vmatmul.bf16.gmra.mxu0 %v583
  %v596 = vpop.f32.mrf.mxu0
  %v597 = vadd.f32 0.0, %v596
  %v598 = vpop.f32.mrf.mxu0
  %599 = vdwg.mxu0
  %v600 = vadd.f32 %v586, %v597
  %v601 = vtanh.pop %v600
  %v602 = vpack.c.bf16 %v601, %v601
  %603 = vst [vmem:[%s218] sm:$0xf] %v602
  %v604 = vld [vmem:[%s238] sm:$0xf]
  %v605 = vunpack.c.l.bf16 %v604
  %606 = vmatpush.bf16.msra.mxu0 %v559
  %607 = vmatpush.bf16.msra.mxu0 %v558
  %608 = vmatpush.bf16.msra.mxu0 %v557
  %609 = vmatpush.bf16.msra.mxu0 %v556
  %610 = vmatpush.bf16.msra.mxu0 %v555
  %611 = vmatpush.bf16.msra.mxu0 %v554
  %612 = vmatpush.bf16.msra.mxu0 %v553
  %613 = vmatpush.bf16.msra.mxu0 %v552
  %614 = vmatmul.bf16.gmra.mxu0 %v602
  %v615 = vpop.f32.mrf.mxu0
  %v616 = vadd.f32 0.0, %v615
  %v617 = vpop.f32.mrf.mxu0
  %618 = vdwg.mxu0
  %v619 = vadd.f32 %v605, %v616
  %v620 = vtanh.pop %v619
  %v621 = vpack.c.bf16 %v620, %v620
  %622 = vst [vmem:[%s238] sm:$0xf] %v621
  %v623 = vld [vmem:[%s258] sm:$0xf]
  %v624 = vunpack.c.l.bf16 %v623
  %625 = vmatpush.bf16.msra.mxu0 %v559
  %626 = vmatpush.bf16.msra.mxu0 %v558
  %627 = vmatpush.bf16.msra.mxu0 %v557
  %628 = vmatpush.bf16.msra.mxu0 %v556
  %629 = vmatpush.bf16.msra.mxu0 %v555
  %630 = vmatpush.bf16.msra.mxu0 %v554
  %631 = vmatpush.bf16.msra.mxu0 %v553
  %632 = vmatpush.bf16.msra.mxu0 %v552
  %633 = vmatmul.bf16.gmra.mxu0 %v621
  %v634 = vpop.f32.mrf.mxu0
  %v635 = vadd.f32 0.0, %v634
  %v636 = vpop.f32.mrf.mxu0
  %637 = vdwg.mxu0
  %v638 = vadd.f32 %v624, %v635
  %v639 = vtanh.pop %v638
  %v640 = vpack.c.bf16 %v639, %v639
  %641 = vst [vmem:[%s258] sm:$0xf] %v640
  %v642 = vld [vmem:[%s278] sm:$0xf]
  %v643 = vunpack.c.l.bf16 %v642
  %644 = vmatpush.bf16.msra.mxu0 %v559
  %645 = vmatpush.bf16.msra.mxu0 %v558
  %646 = vmatpush.bf16.msra.mxu0 %v557
  %647 = vmatpush.bf16.msra.mxu0 %v556
  %648 = vmatpush.bf16.msra.mxu0 %v555
  %649 = vmatpush.bf16.msra.mxu0 %v554
  %650 = vmatpush.bf16.msra.mxu0 %v553
  %651 = vmatpush.bf16.msra.mxu0 %v552
  %652 = vmatmul.bf16.gmra.mxu0 %v640
  %v653 = vpop.f32.mrf.mxu0
  %v654 = vadd.f32 0.0, %v653
  %v655 = vpop.f32.mrf.mxu0
  %656 = vdwg.mxu0
  %v657 = vadd.f32 %v643, %v654
  %v658 = vtanh.pop %v657
  %v659 = vpack.c.bf16 %v658, %v658
  %660 = vst [vmem:[%s278] sm:$0xf] %v659
  %v661 = vld [vmem:[%s298] sm:$0xf]
  %v662 = vunpack.c.l.bf16 %v661
  %663 = vmatpush.bf16.msra.mxu0 %v559
  %664 = vmatpush.bf16.msra.mxu0 %v558
  %665 = vmatpush.bf16.msra.mxu0 %v557
  %666 = vmatpush.bf16.msra.mxu0 %v556
  %667 = vmatpush.bf16.msra.mxu0 %v555
  %668 = vmatpush.bf16.msra.mxu0 %v554
  %669 = vmatpush.bf16.msra.mxu0 %v553
  %670 = vmatpush.bf16.msra.mxu0 %v552
  %671 = vmatmul.bf16.gmra.mxu0 %v659
  %v672 = vpop.f32.mrf.mxu0
  %v673 = vadd.f32 0.0, %v672
  %v674 = vpop.f32.mrf.mxu0
  %675 = vdwg.mxu0
  %v676 = vadd.f32 %v662, %v673
  %v677 = vtanh.pop %v676
  %v678 = vpack.c.bf16 %v677, %v677
  %679 = vst [vmem:[%s298] sm:$0xf] %v678
  %v680 = vld [vmem:[%s318] sm:$0xf]
  %v681 = vunpack.c.l.bf16 %v680
  %682 = vmatpush.bf16.msra.mxu0 %v559
  %683 = vmatpush.bf16.msra.mxu0 %v558
  %684 = vmatpush.bf16.msra.mxu0 %v557
  %685 = vmatpush.bf16.msra.mxu0 %v556
  %686 = vmatpush.bf16.msra.mxu0 %v555
  %687 = vmatpush.bf16.msra.mxu0 %v554
  %688 = vmatpush.bf16.msra.mxu0 %v553
  %689 = vmatpush.bf16.msra.mxu0 %v552
  %690 = vmatmul.bf16.gmra.mxu0 %v678
  %v691 = vpop.f32.mrf.mxu0
  %v692 = vadd.f32 0.0, %v691
  %v693 = vpop.f32.mrf.mxu0
  %694 = vdwg.mxu0
  %v695 = vadd.f32 %v681, %v692
  %v696 = vtanh.pop %v695
  %v697 = vpack.c.bf16 %v696, %v696
  %698 = vst [vmem:[%s318] sm:$0xf] %v697
  %v699 = vld [vmem:[%s338] sm:$0xf]
  %v700 = vunpack.c.l.bf16 %v699
  %701 = vmatpush.bf16.msra.mxu0 %v559
  %702 = vmatpush.bf16.msra.mxu0 %v558
  %703 = vmatpush.bf16.msra.mxu0 %v557
  %704 = vmatpush.bf16.msra.mxu0 %v556
  %705 = vmatpush.bf16.msra.mxu0 %v555
  %706 = vmatpush.bf16.msra.mxu0 %v554
  %707 = vmatpush.bf16.msra.mxu0 %v553
  %708 = vmatpush.bf16.msra.mxu0 %v552
  %709 = vmatmul.bf16.gmra.mxu0 %v697
  %v710 = vpop.f32.mrf.mxu0
  %v711 = vadd.f32 0.0, %v710
  %v712 = vpop.f32.mrf.mxu0
  %713 = vdwg.mxu0
  %v714 = vadd.f32 %v700, %v711
  %v715 = vtanh.pop %v714
  %v716 = vpack.c.bf16 %v715, %v715
  %717 = vst [vmem:[%s338] sm:$0xf] %v716
  %s718 = scalar_lea.vmem %s3, 64
  %v719 = vld [vmem:[%s718] sm:$0xf]
  %v720 = vld [vmem:[%s718 + $0x4] sm:$0xf]
  %v721 = vld [vmem:[%s718 + $0x8] sm:$0xf]
  %v722 = vld [vmem:[%s718 + $0xc] sm:$0xf]
  %v723 = vld [vmem:[%s718 + $0x10] sm:$0xf]
  %v724 = vld [vmem:[%s718 + $0x14] sm:$0xf]
  %v725 = vld [vmem:[%s718 + $0x18] sm:$0xf]
  %v726 = vld [vmem:[%s718 + $0x1c] sm:$0xf]
  %v727 = vld [vmem:[%s718 + $0x20] sm:$0xf]
  %v728 = vld [vmem:[%s718 + $0x24] sm:$0xf]
  %v729 = vld [vmem:[%s718 + $0x28] sm:$0xf]
  %v730 = vld [vmem:[%s718 + $0x2c] sm:$0xf]
  %v731 = vld [vmem:[%s718 + $0x30] sm:$0xf]
  %v732 = vld [vmem:[%s718 + $0x34] sm:$0xf]
  %v733 = vld [vmem:[%s718 + $0x38] sm:$0xf]
  %v734 = vld [vmem:[%s718 + $0x3c] sm:$0xf]
  %v735 = vld [vmem:[%s5 + $0x2] sm:$0x1]
  %v736 = vld [vmem:[#allocation2] sm:$0xf]
  %v737 = vld [vmem:[#allocation2 + $0x4] sm:$0xf]
  %v738 = vld [vmem:[#allocation2 + $0x8] sm:$0xf]
  %v739 = vld [vmem:[#allocation2 + $0xc] sm:$0xf]
  %v740 = vld [vmem:[#allocation2 + $0x10] sm:$0xf]
  %v741 = vld [vmem:[#allocation2 + $0x14] sm:$0xf]
  %v742 = vld [vmem:[#allocation2 + $0x18] sm:$0xf]
  %v743 = vld [vmem:[#allocation2 + $0x1c] sm:$0xf]
  %v744 = vperm.slane %v735, 0
  %v753 = vunpack.c.l.b16 %v736
  %v754 = vunpack.c.l.b16 %v737
  %v755 = vunpack.c.l.b16 %v738
  %v756 = vunpack.c.l.b16 %v739
  %v757 = vunpack.c.l.b16 %v740
  %v758 = vunpack.c.l.b16 %v741
  %v759 = vunpack.c.l.b16 %v742
  %v760 = vunpack.c.l.b16 %v743
  %v761 = vpack.c.b16 %v754, %v753
  %v762 = vpack.c.b16 %v756, %v755
  %v763 = vpack.c.b16 %v758, %v757
  %v764 = vpack.c.b16 %v760, %v759
  %v785 = vunpack.c.l.b16 %v719
  %v786 = vunpack.c.l.b16 %v720
  %v787 = vunpack.c.l.b16 %v721
  %v788 = vunpack.c.l.b16 %v722
  %v789 = vunpack.c.l.b16 %v723
  %v790 = vunpack.c.l.b16 %v724
  %v791 = vunpack.c.l.b16 %v725
  %v792 = vunpack.c.l.b16 %v726
  %v793 = vunpack.c.l.b16 %v727
  %v794 = vunpack.c.l.b16 %v728
  %v795 = vunpack.c.l.b16 %v729
  %v796 = vunpack.c.l.b16 %v730
  %v797 = vunpack.c.l.b16 %v731
  %v798 = vunpack.c.l.b16 %v732
  %v799 = vunpack.c.l.b16 %v733
  %v800 = vunpack.c.l.b16 %v734
  %v801 = vpack.c.b16 %v786, %v785
  %v802 = vpack.c.b16 %v788, %v787
  %v803 = vpack.c.b16 %v790, %v789
  %v804 = vpack.c.b16 %v792, %v791
  %v805 = vpack.c.b16 %v794, %v793
  %v806 = vpack.c.b16 %v796, %v795
  %v807 = vpack.c.b16 %v798, %v797
  %v808 = vpack.c.b16 %v800, %v799
  %817 = vmatpush.bf16.msra.mxu0 %v808
  %818 = vmatpush.bf16.msra.mxu0 %v807
  %819 = vmatpush.bf16.msra.mxu0 %v806
  %820 = vmatpush.bf16.msra.mxu0 %v805
  %821 = vmatpush.bf16.msra.mxu0 %v804
  %822 = vmatpush.bf16.msra.mxu0 %v803
  %823 = vmatpush.bf16.msra.mxu0 %v802
  %824 = vmatpush.bf16.msra.mxu0 %v801
  %825 = vmatmul.bf16.gmra.mxu0 %v761
  %v826 = vpop.f32.mrf.mxu0
  %v827 = vadd.f32 %v744, %v826
  %v828 = vpop.f32.mrf.mxu0
  %v829 = vadd.f32 %v744, %v828
  %830 = vmatmul.bf16.gmra.mxu0 %v762
  %v831 = vpop.f32.mrf.mxu0
  %v832 = vadd.f32 %v744, %v831
  %v833 = vpop.f32.mrf.mxu0
  %v834 = vadd.f32 %v744, %v833
  %835 = vmatmul.bf16.gmra.mxu0 %v763
  %v836 = vpop.f32.mrf.mxu0
  %v837 = vadd.f32 %v744, %v836
  %v838 = vpop.f32.mrf.mxu0
  %v839 = vadd.f32 %v744, %v838
  %840 = vmatmul.bf16.gmra.mxu0 %v764
  %v841 = vpop.f32.mrf.mxu0
  %v842 = vadd.f32 %v744, %v841
  %v843 = vpop.f32.mrf.mxu0
  %v844 = vadd.f32 %v744, %v843
  %845 = vdwg.mxu0
  %v846 = vpack.c.bf16 %v827, %v827
  %v847 = vpack.c.bf16 %v829, %v829
  %v848 = vpack.c.bf16 %v832, %v832
  %v849 = vpack.c.bf16 %v834, %v834
  %v850 = vpack.c.bf16 %v837, %v837
  %v851 = vpack.c.bf16 %v839, %v839
  %v852 = vpack.c.bf16 %v842, %v842
  %v853 = vpack.c.bf16 %v844, %v844
  %854 = vst [vmem:[#allocation2] sm:$0xf] %v846
  %855 = vst [vmem:[#allocation2 + $0x4] sm:$0xf] %v847
  %856 = vst [vmem:[#allocation2 + $0x8] sm:$0xf] %v848
  %857 = vst [vmem:[#allocation2 + $0xc] sm:$0xf] %v849
  %858 = vst [vmem:[#allocation2 + $0x10] sm:$0xf] %v850
  %859 = vst [vmem:[#allocation2 + $0x14] sm:$0xf] %v851
  %860 = vst [vmem:[#allocation2 + $0x18] sm:$0xf] %v852
  %861 = vst [vmem:[#allocation2 + $0x1c] sm:$0xf] %v853
  %s862 = scalar_lea.vmem %s4, 128
  %v863 = vld [vmem:[%s862] sm:$0xf]
  %v864 = vld [vmem:[%s862 + $0x4] sm:$0xf]
  %v865 = vld [vmem:[%s862 + $0x8] sm:$0xf]
  %v866 = vld [vmem:[%s862 + $0xc] sm:$0xf]
  %v867 = vld [vmem:[%s862 + $0x10] sm:$0xf]
  %v868 = vld [vmem:[%s862 + $0x14] sm:$0xf]
  %v869 = vld [vmem:[%s862 + $0x18] sm:$0xf]
  %v870 = vld [vmem:[%s862 + $0x1c] sm:$0xf]
  %v871 = vld [vmem:[%s862 + $0x20] sm:$0xf]
  %v872 = vld [vmem:[%s862 + $0x24] sm:$0xf]
  %v873 = vld [vmem:[%s862 + $0x28] sm:$0xf]
  %v874 = vld [vmem:[%s862 + $0x2c] sm:$0xf]
  %v875 = vld [vmem:[%s862 + $0x30] sm:$0xf]
  %v876 = vld [vmem:[%s862 + $0x34] sm:$0xf]
  %v877 = vld [vmem:[%s862 + $0x38] sm:$0xf]
  %v878 = vld [vmem:[%s862 + $0x3c] sm:$0xf]
  %v879 = vld [vmem:[#allocation2] sm:$0xf]
  %v880 = vunpack.c.l.bf16 %v879
  %v897 = vunpack.c.l.b16 %v863
  %v898 = vunpack.c.l.b16 %v864
  %v899 = vunpack.c.l.b16 %v865
  %v900 = vunpack.c.l.b16 %v866
  %v901 = vunpack.c.l.b16 %v867
  %v902 = vunpack.c.l.b16 %v868
  %v903 = vunpack.c.l.b16 %v869
  %v904 = vunpack.c.l.b16 %v870
  %v905 = vunpack.c.l.b16 %v871
  %v906 = vunpack.c.l.b16 %v872
  %v907 = vunpack.c.l.b16 %v873
  %v908 = vunpack.c.l.b16 %v874
  %v909 = vunpack.c.l.b16 %v875
  %v910 = vunpack.c.l.b16 %v876
  %v911 = vunpack.c.l.b16 %v877
  %v912 = vunpack.c.l.b16 %v878
  %v913 = vpack.c.b16 %v898, %v897
  %v914 = vpack.c.b16 %v900, %v899
  %v915 = vpack.c.b16 %v902, %v901
  %v916 = vpack.c.b16 %v904, %v903
  %v917 = vpack.c.b16 %v906, %v905
  %v918 = vpack.c.b16 %v908, %v907
  %v919 = vpack.c.b16 %v910, %v909
  %v920 = vpack.c.b16 %v912, %v911
  %929 = vmatpush.bf16.msra.mxu0 %v920
  %930 = vmatpush.bf16.msra.mxu0 %v919
  %931 = vmatpush.bf16.msra.mxu0 %v918
  %932 = vmatpush.bf16.msra.mxu0 %v917
  %933 = vmatpush.bf16.msra.mxu0 %v916
  %934 = vmatpush.bf16.msra.mxu0 %v915
  %935 = vmatpush.bf16.msra.mxu0 %v914
  %936 = vmatpush.bf16.msra.mxu0 %v913
  %937 = vmatmul.bf16.gmra.mxu0 0
  %v938 = vpop.f32.mrf.mxu0
  %v939 = vadd.f32 0.0, %v938
  %v940 = vpop.f32.mrf.mxu0
  %941 = vdwg.mxu0
  %v942 = vadd.f32 %v880, %v939
  %v943 = vtanh.pop %v942
  %v944 = vpack.c.bf16 %v943, %v943
  %945 = vst [vmem:[#allocation2] sm:$0xf] %v944
  %v946 = vld [vmem:[%s218] sm:$0xf]
  %v947 = vunpack.c.l.bf16 %v946
  %948 = vmatpush.bf16.msra.mxu0 %v920
  %949 = vmatpush.bf16.msra.mxu0 %v919
  %950 = vmatpush.bf16.msra.mxu0 %v918
  %951 = vmatpush.bf16.msra.mxu0 %v917
  %952 = vmatpush.bf16.msra.mxu0 %v916
  %953 = vmatpush.bf16.msra.mxu0 %v915
  %954 = vmatpush.bf16.msra.mxu0 %v914
  %955 = vmatpush.bf16.msra.mxu0 %v913
  %956 = vmatmul.bf16.gmra.mxu0 %v944
  %v957 = vpop.f32.mrf.mxu0
  %v958 = vadd.f32 0.0, %v957
  %v959 = vpop.f32.mrf.mxu0
  %960 = vdwg.mxu0
  %v961 = vadd.f32 %v947, %v958
  %v962 = vtanh.pop %v961
  %v963 = vpack.c.bf16 %v962, %v962
  %964 = vst [vmem:[%s218] sm:$0xf] %v963
  %v965 = vld [vmem:[%s238] sm:$0xf]
  %v966 = vunpack.c.l.bf16 %v965
  %967 = vmatpush.bf16.msra.mxu0 %v920
  %968 = vmatpush.bf16.msra.mxu0 %v919
  %969 = vmatpush.bf16.msra.mxu0 %v918
  %970 = vmatpush.bf16.msra.mxu0 %v917
  %971 = vmatpush.bf16.msra.mxu0 %v916
  %972 = vmatpush.bf16.msra.mxu0 %v915
  %973 = vmatpush.bf16.msra.mxu0 %v914
  %974 = vmatpush.bf16.msra.mxu0 %v913
  %975 = vmatmul.bf16.gmra.mxu0 %v963
  %v976 = vpop.f32.mrf.mxu0
  %v977 = vadd.f32 0.0, %v976
  %v978 = vpop.f32.mrf.mxu0
  %979 = vdwg.mxu0
  %v980 = vadd.f32 %v966, %v977
  %v981 = vtanh.pop %v980
  %v982 = vpack.c.bf16 %v981, %v981
  %983 = vst [vmem:[%s238] sm:$0xf] %v982
  %v984 = vld [vmem:[%s258] sm:$0xf]
  %v985 = vunpack.c.l.bf16 %v984
  %986 = vmatpush.bf16.msra.mxu0 %v920
  %987 = vmatpush.bf16.msra.mxu0 %v919
  %988 = vmatpush.bf16.msra.mxu0 %v918
  %989 = vmatpush.bf16.msra.mxu0 %v917
  %990 = vmatpush.bf16.msra.mxu0 %v916
  %991 = vmatpush.bf16.msra.mxu0 %v915
  %992 = vmatpush.bf16.msra.mxu0 %v914
  %993 = vmatpush.bf16.msra.mxu0 %v913
  %994 = vmatmul.bf16.gmra.mxu0 %v982
  %v995 = vpop.f32.mrf.mxu0
  %v996 = vadd.f32 0.0, %v995
  %v997 = vpop.f32.mrf.mxu0
  %998 = vdwg.mxu0
  %v999 = vadd.f32 %v985, %v996
  %v1000 = vtanh.pop %v999
  %v1001 = vpack.c.bf16 %v1000, %v1000
  %1002 = vst [vmem:[%s258] sm:$0xf] %v1001
  %v1003 = vld [vmem:[%s278] sm:$0xf]
  %v1004 = vunpack.c.l.bf16 %v1003
  %1005 = vmatpush.bf16.msra.mxu0 %v920
  %1006 = vmatpush.bf16.msra.mxu0 %v919
  %1007 = vmatpush.bf16.msra.mxu0 %v918
  %1008 = vmatpush.bf16.msra.mxu0 %v917
  %1009 = vmatpush.bf16.msra.mxu0 %v916
  %1010 = vmatpush.bf16.msra.mxu0 %v915
  %1011 = vmatpush.bf16.msra.mxu0 %v914
  %1012 = vmatpush.bf16.msra.mxu0 %v913
  %1013 = vmatmul.bf16.gmra.mxu0 %v1001
  %v1014 = vpop.f32.mrf.mxu0
  %v1015 = vadd.f32 0.0, %v1014
  %v1016 = vpop.f32.mrf.mxu0
  %1017 = vdwg.mxu0
  %v1018 = vadd.f32 %v1004, %v1015
  %v1019 = vtanh.pop %v1018
  %v1020 = vpack.c.bf16 %v1019, %v1019
  %1021 = vst [vmem:[%s278] sm:$0xf] %v1020
  %v1022 = vld [vmem:[%s298] sm:$0xf]
  %v1023 = vunpack.c.l.bf16 %v1022
  %1024 = vmatpush.bf16.msra.mxu0 %v920
  %1025 = vmatpush.bf16.msra.mxu0 %v919
  %1026 = vmatpush.bf16.msra.mxu0 %v918
  %1027 = vmatpush.bf16.msra.mxu0 %v917
  %1028 = vmatpush.bf16.msra.mxu0 %v916
  %1029 = vmatpush.bf16.msra.mxu0 %v915
  %1030 = vmatpush.bf16.msra.mxu0 %v914
  %1031 = vmatpush.bf16.msra.mxu0 %v913
  %1032 = vmatmul.bf16.gmra.mxu0 %v1020
  %v1033 = vpop.f32.mrf.mxu0
  %v1034 = vadd.f32 0.0, %v1033
  %v1035 = vpop.f32.mrf.mxu0
  %1036 = vdwg.mxu0
  %v1037 = vadd.f32 %v1023, %v1034
  %v1038 = vtanh.pop %v1037
  %v1039 = vpack.c.bf16 %v1038, %v1038
  %1040 = vst [vmem:[%s298] sm:$0xf] %v1039
  %v1041 = vld [vmem:[%s318] sm:$0xf]
  %v1042 = vunpack.c.l.bf16 %v1041
  %1043 = vmatpush.bf16.msra.mxu0 %v920
  %1044 = vmatpush.bf16.msra.mxu0 %v919
  %1045 = vmatpush.bf16.msra.mxu0 %v918
  %1046 = vmatpush.bf16.msra.mxu0 %v917
  %1047 = vmatpush.bf16.msra.mxu0 %v916
  %1048 = vmatpush.bf16.msra.mxu0 %v915
  %1049 = vmatpush.bf16.msra.mxu0 %v914
  %1050 = vmatpush.bf16.msra.mxu0 %v913
  %1051 = vmatmul.bf16.gmra.mxu0 %v1039
  %v1052 = vpop.f32.mrf.mxu0
  %v1053 = vadd.f32 0.0, %v1052
  %v1054 = vpop.f32.mrf.mxu0
  %1055 = vdwg.mxu0
  %v1056 = vadd.f32 %v1042, %v1053
  %v1057 = vtanh.pop %v1056
  %v1058 = vpack.c.bf16 %v1057, %v1057
  %1059 = vst [vmem:[%s318] sm:$0xf] %v1058
  %v1060 = vld [vmem:[%s338] sm:$0xf]
  %v1061 = vunpack.c.l.bf16 %v1060
  %1062 = vmatpush.bf16.msra.mxu0 %v920
  %1063 = vmatpush.bf16.msra.mxu0 %v919
  %1064 = vmatpush.bf16.msra.mxu0 %v918
  %1065 = vmatpush.bf16.msra.mxu0 %v917
  %1066 = vmatpush.bf16.msra.mxu0 %v916
  %1067 = vmatpush.bf16.msra.mxu0 %v915
  %1068 = vmatpush.bf16.msra.mxu0 %v914
  %1069 = vmatpush.bf16.msra.mxu0 %v913
  %1070 = vmatmul.bf16.gmra.mxu0 %v1058
  %v1071 = vpop.f32.mrf.mxu0
  %v1072 = vadd.f32 0.0, %v1071
  %v1073 = vpop.f32.mrf.mxu0
  %1074 = vdwg.mxu0
  %v1075 = vadd.f32 %v1061, %v1072
  %v1076 = vtanh.pop %v1075
  %v1077 = vpack.c.bf16 %v1076, %v1076
  %1078 = vst [vmem:[%s338] sm:$0xf] %v1077
  %s1079 = scalar_lea.vmem %s3, 128
  %v1080 = vld [vmem:[%s1079] sm:$0xf]
  %v1081 = vld [vmem:[%s1079 + $0x4] sm:$0xf]
  %v1082 = vld [vmem:[%s1079 + $0x8] sm:$0xf]
  %v1083 = vld [vmem:[%s1079 + $0xc] sm:$0xf]
  %v1084 = vld [vmem:[%s1079 + $0x10] sm:$0xf]
  %v1085 = vld [vmem:[%s1079 + $0x14] sm:$0xf]
  %v1086 = vld [vmem:[%s1079 + $0x18] sm:$0xf]
  %v1087 = vld [vmem:[%s1079 + $0x1c] sm:$0xf]
  %v1088 = vld [vmem:[%s1079 + $0x20] sm:$0xf]
  %v1089 = vld [vmem:[%s1079 + $0x24] sm:$0xf]
  %v1090 = vld [vmem:[%s1079 + $0x28] sm:$0xf]
  %v1091 = vld [vmem:[%s1079 + $0x2c] sm:$0xf]
  %v1092 = vld [vmem:[%s1079 + $0x30] sm:$0xf]
  %v1093 = vld [vmem:[%s1079 + $0x34] sm:$0xf]
  %v1094 = vld [vmem:[%s1079 + $0x38] sm:$0xf]
  %v1095 = vld [vmem:[%s1079 + $0x3c] sm:$0xf]
  %v1096 = vld [vmem:[%s5 + $0x3] sm:$0x1]
  %v1097 = vld [vmem:[#allocation2] sm:$0xf]
  %v1098 = vld [vmem:[#allocation2 + $0x4] sm:$0xf]
  %v1099 = vld [vmem:[#allocation2 + $0x8] sm:$0xf]
  %v1100 = vld [vmem:[#allocation2 + $0xc] sm:$0xf]
  %v1101 = vld [vmem:[#allocation2 + $0x10] sm:$0xf]
  %v1102 = vld [vmem:[#allocation2 + $0x14] sm:$0xf]
  %v1103 = vld [vmem:[#allocation2 + $0x18] sm:$0xf]
  %v1104 = vld [vmem:[#allocation2 + $0x1c] sm:$0xf]
  %v1105 = vperm.slane %v1096, 0
  %v1114 = vunpack.c.l.b16 %v1097
  %v1115 = vunpack.c.l.b16 %v1098
  %v1116 = vunpack.c.l.b16 %v1099
  %v1117 = vunpack.c.l.b16 %v1100
  %v1118 = vunpack.c.l.b16 %v1101
  %v1119 = vunpack.c.l.b16 %v1102
  %v1120 = vunpack.c.l.b16 %v1103
  %v1121 = vunpack.c.l.b16 %v1104
  %v1122 = vpack.c.b16 %v1115, %v1114
  %v1123 = vpack.c.b16 %v1117, %v1116
  %v1124 = vpack.c.b16 %v1119, %v1118
  %v1125 = vpack.c.b16 %v1121, %v1120
  %v1146 = vunpack.c.l.b16 %v1080
  %v1147 = vunpack.c.l.b16 %v1081
  %v1148 = vunpack.c.l.b16 %v1082
  %v1149 = vunpack.c.l.b16 %v1083
  %v1150 = vunpack.c.l.b16 %v1084
  %v1151 = vunpack.c.l.b16 %v1085
  %v1152 = vunpack.c.l.b16 %v1086
  %v1153 = vunpack.c.l.b16 %v1087
  %v1154 = vunpack.c.l.b16 %v1088
  %v1155 = vunpack.c.l.b16 %v1089
  %v1156 = vunpack.c.l.b16 %v1090
  %v1157 = vunpack.c.l.b16 %v1091
  %v1158 = vunpack.c.l.b16 %v1092
  %v1159 = vunpack.c.l.b16 %v1093
  %v1160 = vunpack.c.l.b16 %v1094
  %v1161 = vunpack.c.l.b16 %v1095
  %v1162 = vpack.c.b16 %v1147, %v1146
  %v1163 = vpack.c.b16 %v1149, %v1148
  %v1164 = vpack.c.b16 %v1151, %v1150
  %v1165 = vpack.c.b16 %v1153, %v1152
  %v1166 = vpack.c.b16 %v1155, %v1154
  %v1167 = vpack.c.b16 %v1157, %v1156
  %v1168 = vpack.c.b16 %v1159, %v1158
  %v1169 = vpack.c.b16 %v1161, %v1160
  %1178 = vmatpush.bf16.msra.mxu0 %v1169
  %1179 = vmatpush.bf16.msra.mxu0 %v1168
  %1180 = vmatpush.bf16.msra.mxu0 %v1167
  %1181 = vmatpush.bf16.msra.mxu0 %v1166
  %1182 = vmatpush.bf16.msra.mxu0 %v1165
  %1183 = vmatpush.bf16.msra.mxu0 %v1164
  %1184 = vmatpush.bf16.msra.mxu0 %v1163
  %1185 = vmatpush.bf16.msra.mxu0 %v1162
  %1186 = vmatmul.bf16.gmra.mxu0 %v1122
  %v1187 = vpop.f32.mrf.mxu0
  %v1188 = vadd.f32 %v1105, %v1187
  %v1189 = vpop.f32.mrf.mxu0
  %v1190 = vadd.f32 %v1105, %v1189
  %1191 = vmatmul.bf16.gmra.mxu0 %v1123
  %v1192 = vpop.f32.mrf.mxu0
  %v1193 = vadd.f32 %v1105, %v1192
  %v1194 = vpop.f32.mrf.mxu0
  %v1195 = vadd.f32 %v1105, %v1194
  %1196 = vmatmul.bf16.gmra.mxu0 %v1124
  %v1197 = vpop.f32.mrf.mxu0
  %v1198 = vadd.f32 %v1105, %v1197
  %v1199 = vpop.f32.mrf.mxu0
  %v1200 = vadd.f32 %v1105, %v1199
  %1201 = vmatmul.bf16.gmra.mxu0 %v1125
  %v1202 = vpop.f32.mrf.mxu0
  %v1203 = vadd.f32 %v1105, %v1202
  %v1204 = vpop.f32.mrf.mxu0
  %v1205 = vadd.f32 %v1105, %v1204
  %1206 = vdwg.mxu0
  %v1207 = vpack.c.bf16 %v1188, %v1188
  %v1208 = vpack.c.bf16 %v1190, %v1190
  %v1209 = vpack.c.bf16 %v1193, %v1193
  %v1210 = vpack.c.bf16 %v1195, %v1195
  %v1211 = vpack.c.bf16 %v1198, %v1198
  %v1212 = vpack.c.bf16 %v1200, %v1200
  %v1213 = vpack.c.bf16 %v1203, %v1203
  %v1214 = vpack.c.bf16 %v1205, %v1205
  %1215 = vst [vmem:[#allocation2] sm:$0xf] %v1207
  %1216 = vst [vmem:[#allocation2 + $0x4] sm:$0xf] %v1208
  %1217 = vst [vmem:[#allocation2 + $0x8] sm:$0xf] %v1209
  %1218 = vst [vmem:[#allocation2 + $0xc] sm:$0xf] %v1210
  %1219 = vst [vmem:[#allocation2 + $0x10] sm:$0xf] %v1211
  %1220 = vst [vmem:[#allocation2 + $0x14] sm:$0xf] %v1212
  %1221 = vst [vmem:[#allocation2 + $0x18] sm:$0xf] %v1213
  %1222 = vst [vmem:[#allocation2 + $0x1c] sm:$0xf] %v1214
  %s1223 = scalar_lea.vmem %s4, 192
  %v1224 = vld [vmem:[%s1223] sm:$0xf]
  %v1225 = vld [vmem:[%s1223 + $0x4] sm:$0xf]
  %v1226 = vld [vmem:[%s1223 + $0x8] sm:$0xf]
  %v1227 = vld [vmem:[%s1223 + $0xc] sm:$0xf]
  %v1228 = vld [vmem:[%s1223 + $0x10] sm:$0xf]
  %v1229 = vld [vmem:[%s1223 + $0x14] sm:$0xf]
  %v1230 = vld [vmem:[%s1223 + $0x18] sm:$0xf]
  %v1231 = vld [vmem:[%s1223 + $0x1c] sm:$0xf]
  %v1232 = vld [vmem:[%s1223 + $0x20] sm:$0xf]
  %v1233 = vld [vmem:[%s1223 + $0x24] sm:$0xf]
  %v1234 = vld [vmem:[%s1223 + $0x28] sm:$0xf]
  %v1235 = vld [vmem:[%s1223 + $0x2c] sm:$0xf]
  %v1236 = vld [vmem:[%s1223 + $0x30] sm:$0xf]
  %v1237 = vld [vmem:[%s1223 + $0x34] sm:$0xf]
  %v1238 = vld [vmem:[%s1223 + $0x38] sm:$0xf]
  %v1239 = vld [vmem:[%s1223 + $0x3c] sm:$0xf]
  %v1240 = vld [vmem:[#allocation2] sm:$0xf]
  %v1241 = vunpack.c.l.bf16 %v1240
  %v1258 = vunpack.c.l.b16 %v1224
  %v1259 = vunpack.c.l.b16 %v1225
  %v1260 = vunpack.c.l.b16 %v1226
  %v1261 = vunpack.c.l.b16 %v1227
  %v1262 = vunpack.c.l.b16 %v1228
  %v1263 = vunpack.c.l.b16 %v1229
  %v1264 = vunpack.c.l.b16 %v1230
  %v1265 = vunpack.c.l.b16 %v1231
  %v1266 = vunpack.c.l.b16 %v1232
  %v1267 = vunpack.c.l.b16 %v1233
  %v1268 = vunpack.c.l.b16 %v1234
  %v1269 = vunpack.c.l.b16 %v1235
  %v1270 = vunpack.c.l.b16 %v1236
  %v1271 = vunpack.c.l.b16 %v1237
  %v1272 = vunpack.c.l.b16 %v1238
  %v1273 = vunpack.c.l.b16 %v1239
  %v1274 = vpack.c.b16 %v1259, %v1258
  %v1275 = vpack.c.b16 %v1261, %v1260
  %v1276 = vpack.c.b16 %v1263, %v1262
  %v1277 = vpack.c.b16 %v1265, %v1264
  %v1278 = vpack.c.b16 %v1267, %v1266
  %v1279 = vpack.c.b16 %v1269, %v1268
  %v1280 = vpack.c.b16 %v1271, %v1270
  %v1281 = vpack.c.b16 %v1273, %v1272
  %1290 = vmatpush.bf16.msra.mxu0 %v1281
  %1291 = vmatpush.bf16.msra.mxu0 %v1280
  %1292 = vmatpush.bf16.msra.mxu0 %v1279
  %1293 = vmatpush.bf16.msra.mxu0 %v1278
  %1294 = vmatpush.bf16.msra.mxu0 %v1277
  %1295 = vmatpush.bf16.msra.mxu0 %v1276
  %1296 = vmatpush.bf16.msra.mxu0 %v1275
  %1297 = vmatpush.bf16.msra.mxu0 %v1274
  %1298 = vmatmul.bf16.gmra.mxu0 0
  %v1299 = vpop.f32.mrf.mxu0
  %v1300 = vadd.f32 0.0, %v1299
  %v1301 = vpop.f32.mrf.mxu0
  %1302 = vdwg.mxu0
  %v1303 = vadd.f32 %v1241, %v1300
  %v1304 = vtanh.pop %v1303
  %vm1305 = vcmp.gt.s32.totalorder %v30, 0
  %v1306 = vsel %vm1305, 1, 0
  %v1307 = vcvt.s32.f32 %v1306
  %v1308 = vpack.c.bf16 %v1304, %v1304
  %1310 = vset.pattern.permute.xlu0 0
  %1311 = vperm.xlu0 %1310, %v1307
  %v1312 = vpop.permute.xlu0 %1311
  %v1314 = vmul.f32 %v1304, %v1312
  %v1315 = vadd.f32 %v1314, 0.0
  %v1316 = vld [vmem:[%s218] sm:$0xf]
  %v1317 = vunpack.c.l.bf16 %v1316
  %1318 = vmatpush.bf16.msra.mxu0 %v1281
  %1319 = vmatpush.bf16.msra.mxu0 %v1280
  %1320 = vmatpush.bf16.msra.mxu0 %v1279
  %1321 = vmatpush.bf16.msra.mxu0 %v1278
  %1322 = vmatpush.bf16.msra.mxu0 %v1277
  %1323 = vmatpush.bf16.msra.mxu0 %v1276
  %1324 = vmatpush.bf16.msra.mxu0 %v1275
  %1325 = vmatpush.bf16.msra.mxu0 %v1274
  %1326 = vmatmul.bf16.gmra.mxu0 %v1308
  %v1327 = vpop.f32.mrf.mxu0
  %v1328 = vadd.f32 0.0, %v1327
  %v1329 = vpop.f32.mrf.mxu0
  %1330 = vdwg.mxu0
  %v1331 = vadd.f32 %v1317, %v1328
  %v1332 = vtanh.pop %v1331
  %vm1333 = vcmp.gt.s32.totalorder %v30, 1
  %v1334 = vsel %vm1333, 1, 0
  %v1335 = vcvt.s32.f32 %v1334
  %v1336 = vpack.c.bf16 %v1332, %v1332
  %1338 = vset.pattern.permute.xlu0 0
  %1339 = vperm.xlu0 %1338, %v1335
  %v1340 = vpop.permute.xlu0 %1339
  %v1342 = vmul.f32 %v1332, %v1340
  %v1343 = vadd.f32 %v1315, %v1342
  %v1344 = vld [vmem:[%s238] sm:$0xf]
  %v1345 = vunpack.c.l.bf16 %v1344
  %1346 = vmatpush.bf16.msra.mxu0 %v1281
  %1347 = vmatpush.bf16.msra.mxu0 %v1280
  %1348 = vmatpush.bf16.msra.mxu0 %v1279
  %1349 = vmatpush.bf16.msra.mxu0 %v1278
  %1350 = vmatpush.bf16.msra.mxu0 %v1277
  %1351 = vmatpush.bf16.msra.mxu0 %v1276
  %1352 = vmatpush.bf16.msra.mxu0 %v1275
  %1353 = vmatpush.bf16.msra.mxu0 %v1274
  %1354 = vmatmul.bf16.gmra.mxu0 %v1336
  %v1355 = vpop.f32.mrf.mxu0
  %v1356 = vadd.f32 0.0, %v1355
  %v1357 = vpop.f32.mrf.mxu0
  %1358 = vdwg.mxu0
  %v1359 = vadd.f32 %v1345, %v1356
  %v1360 = vtanh.pop %v1359
  %vm1361 = vcmp.gt.s32.totalorder %v30, 2
  %v1362 = vsel %vm1361, 1, 0
  %v1363 = vcvt.s32.f32 %v1362
  %v1364 = vpack.c.bf16 %v1360, %v1360
  %1366 = vset.pattern.permute.xlu0 0
  %1367 = vperm.xlu0 %1366, %v1363
  %v1368 = vpop.permute.xlu0 %1367
  %v1370 = vmul.f32 %v1360, %v1368
  %v1371 = vadd.f32 %v1343, %v1370
  %v1372 = vld [vmem:[%s258] sm:$0xf]
  %v1373 = vunpack.c.l.bf16 %v1372
  %1374 = vmatpush.bf16.msra.mxu0 %v1281
  %1375 = vmatpush.bf16.msra.mxu0 %v1280
  %1376 = vmatpush.bf16.msra.mxu0 %v1279
  %1377 = vmatpush.bf16.msra.mxu0 %v1278
  %1378 = vmatpush.bf16.msra.mxu0 %v1277
  %1379 = vmatpush.bf16.msra.mxu0 %v1276
  %1380 = vmatpush.bf16.msra.mxu0 %v1275
  %1381 = vmatpush.bf16.msra.mxu0 %v1274
  %1382 = vmatmul.bf16.gmra.mxu0 %v1364
  %v1383 = vpop.f32.mrf.mxu0
  %v1384 = vadd.f32 0.0, %v1383
  %v1385 = vpop.f32.mrf.mxu0
  %1386 = vdwg.mxu0
  %v1387 = vadd.f32 %v1373, %v1384
  %v1388 = vtanh.pop %v1387
  %vm1389 = vcmp.gt.s32.totalorder %v30, 3
  %v1390 = vsel %vm1389, 1, 0
  %v1391 = vcvt.s32.f32 %v1390
  %v1392 = vpack.c.bf16 %v1388, %v1388
  %1394 = vset.pattern.permute.xlu0 0
  %1395 = vperm.xlu0 %1394, %v1391
  %v1396 = vpop.permute.xlu0 %1395
  %v1398 = vmul.f32 %v1388, %v1396
  %v1399 = vadd.f32 %v1371, %v1398
  %v1400 = vld [vmem:[%s278] sm:$0xf]
  %v1401 = vunpack.c.l.bf16 %v1400
  %1402 = vmatpush.bf16.msra.mxu0 %v1281
  %1403 = vmatpush.bf16.msra.mxu0 %v1280
  %1404 = vmatpush.bf16.msra.mxu0 %v1279
  %1405 = vmatpush.bf16.msra.mxu0 %v1278
  %1406 = vmatpush.bf16.msra.mxu0 %v1277
  %1407 = vmatpush.bf16.msra.mxu0 %v1276
  %1408 = vmatpush.bf16.msra.mxu0 %v1275
  %1409 = vmatpush.bf16.msra.mxu0 %v1274
  %1410 = vmatmul.bf16.gmra.mxu0 %v1392
  %v1411 = vpop.f32.mrf.mxu0
  %v1412 = vadd.f32 0.0, %v1411
  %v1413 = vpop.f32.mrf.mxu0
  %1414 = vdwg.mxu0
  %v1415 = vadd.f32 %v1401, %v1412
  %v1416 = vtanh.pop %v1415
  %vm1417 = vcmp.gt.s32.totalorder %v30, 4
  %v1418 = vsel %vm1417, 1, 0
  %v1419 = vcvt.s32.f32 %v1418
  %v1420 = vpack.c.bf16 %v1416, %v1416
  %1422 = vset.pattern.permute.xlu0 0
  %1423 = vperm.xlu0 %1422, %v1419
  %v1424 = vpop.permute.xlu0 %1423
  %v1426 = vmul.f32 %v1416, %v1424
  %v1427 = vadd.f32 %v1399, %v1426
  %v1428 = vld [vmem:[%s298] sm:$0xf]
  %v1429 = vunpack.c.l.bf16 %v1428
  %1430 = vmatpush.bf16.msra.mxu0 %v1281
  %1431 = vmatpush.bf16.msra.mxu0 %v1280
  %1432 = vmatpush.bf16.msra.mxu0 %v1279
  %1433 = vmatpush.bf16.msra.mxu0 %v1278
  %1434 = vmatpush.bf16.msra.mxu0 %v1277
  %1435 = vmatpush.bf16.msra.mxu0 %v1276
  %1436 = vmatpush.bf16.msra.mxu0 %v1275
  %1437 = vmatpush.bf16.msra.mxu0 %v1274
  %1438 = vmatmul.bf16.gmra.mxu0 %v1420
  %v1439 = vpop.f32.mrf.mxu0
  %v1440 = vadd.f32 0.0, %v1439
  %v1441 = vpop.f32.mrf.mxu0
  %1442 = vdwg.mxu0
  %v1443 = vadd.f32 %v1429, %v1440
  %v1444 = vtanh.pop %v1443
  %vm1445 = vcmp.gt.s32.totalorder %v30, 5
  %v1446 = vsel %vm1445, 1, 0
  %v1447 = vcvt.s32.f32 %v1446
  %v1448 = vpack.c.bf16 %v1444, %v1444
  %1450 = vset.pattern.permute.xlu0 0
  %1451 = vperm.xlu0 %1450, %v1447
  %v1452 = vpop.permute.xlu0 %1451
  %v1454 = vmul.f32 %v1444, %v1452
  %v1455 = vadd.f32 %v1427, %v1454
  %v1456 = vld [vmem:[%s318] sm:$0xf]
  %v1457 = vunpack.c.l.bf16 %v1456
  %1458 = vmatpush.bf16.msra.mxu0 %v1281
  %1459 = vmatpush.bf16.msra.mxu0 %v1280
  %1460 = vmatpush.bf16.msra.mxu0 %v1279
  %1461 = vmatpush.bf16.msra.mxu0 %v1278
  %1462 = vmatpush.bf16.msra.mxu0 %v1277
  %1463 = vmatpush.bf16.msra.mxu0 %v1276
  %1464 = vmatpush.bf16.msra.mxu0 %v1275
  %1465 = vmatpush.bf16.msra.mxu0 %v1274
  %1466 = vmatmul.bf16.gmra.mxu0 %v1448
  %v1467 = vpop.f32.mrf.mxu0
  %v1468 = vadd.f32 0.0, %v1467
  %v1469 = vpop.f32.mrf.mxu0
  %1470 = vdwg.mxu0
  %v1471 = vadd.f32 %v1457, %v1468
  %v1472 = vtanh.pop %v1471
  %vm1473 = vcmp.gt.s32.totalorder %v30, 6
  %v1474 = vsel %vm1473, 1, 0
  %v1475 = vcvt.s32.f32 %v1474
  %v1476 = vpack.c.bf16 %v1472, %v1472
  %1478 = vset.pattern.permute.xlu0 0
  %1479 = vperm.xlu0 %1478, %v1475
  %v1480 = vpop.permute.xlu0 %1479
  %v1482 = vmul.f32 %v1472, %v1480
  %v1483 = vadd.f32 %v1455, %v1482
  %v1484 = vld [vmem:[%s338] sm:$0xf]
  %v1485 = vunpack.c.l.bf16 %v1484
  %1486 = vmatpush.bf16.msra.mxu0 %v1281
  %1487 = vmatpush.bf16.msra.mxu0 %v1280
  %1488 = vmatpush.bf16.msra.mxu0 %v1279
  %1489 = vmatpush.bf16.msra.mxu0 %v1278
  %1490 = vmatpush.bf16.msra.mxu0 %v1277
  %1491 = vmatpush.bf16.msra.mxu0 %v1276
  %1492 = vmatpush.bf16.msra.mxu0 %v1275
  %1493 = vmatpush.bf16.msra.mxu0 %v1274
  %1494 = vmatmul.bf16.gmra.mxu0 %v1476
  %v1495 = vpop.f32.mrf.mxu0
  %v1496 = vadd.f32 0.0, %v1495
  %v1497 = vpop.f32.mrf.mxu0
  %1498 = vdwg.mxu0
  %v1499 = vadd.f32 %v1485, %v1496
  %v1500 = vtanh.pop %v1499
  %vm1501 = vcmp.gt.s32.totalorder %v30, 7
  %v1502 = vsel %vm1501, 1, 0
  %v1503 = vcvt.s32.f32 %v1502
  %1505 = vset.pattern.permute.xlu0 0
  %1506 = vperm.xlu0 %1505, %v1503
  %v1507 = vpop.permute.xlu0 %1506
  %v1509 = vmul.f32 %v1500, %v1507
  %v1510 = vadd.f32 %v1483, %v1509
  %v1511 = vmul.f32 %v1510, 0.125
  %v1512 = vpack.c.bf16 %v1511, %v1511
  %v1513 = vld [vmem:[%s6] sm:$0xf]
  %v1514 = vld [vmem:[%s6 + $0x4] sm:$0xf]
  %v1515 = vld [vmem:[%s6 + $0x8] sm:$0xf]
  %v1516 = vld [vmem:[%s6 + $0xc] sm:$0xf]
  %v1517 = vld [vmem:[%s6 + $0x10] sm:$0xf]
  %v1518 = vld [vmem:[%s6 + $0x14] sm:$0xf]
  %v1519 = vld [vmem:[%s6 + $0x18] sm:$0xf]
  %v1520 = vld [vmem:[%s6 + $0x1c] sm:$0xf]
  %v1521 = vld [vmem:[%s6 + $0x20] sm:$0xf]
  %v1522 = vld [vmem:[%s6 + $0x24] sm:$0xf]
  %v1523 = vld [vmem:[%s6 + $0x28] sm:$0xf]
  %v1524 = vld [vmem:[%s6 + $0x2c] sm:$0xf]
  %v1525 = vld [vmem:[%s6 + $0x30] sm:$0xf]
  %v1526 = vld [vmem:[%s6 + $0x34] sm:$0xf]
  %v1527 = vld [vmem:[%s6 + $0x38] sm:$0xf]
  %v1528 = vld [vmem:[%s6 + $0x3c] sm:$0xf]
  %v1529 = vld [vmem:[%s7] sm:$0x1]
  %v1531 = vperm.slane %v1529, 0
  %v1549 = vunpack.c.l.b16 %v1513
  %v1550 = vunpack.c.l.b16 %v1514
  %v1551 = vunpack.c.l.b16 %v1515
  %v1552 = vunpack.c.l.b16 %v1516
  %v1553 = vunpack.c.l.b16 %v1517
  %v1554 = vunpack.c.l.b16 %v1518
  %v1555 = vunpack.c.l.b16 %v1519
  %v1556 = vunpack.c.l.b16 %v1520
  %v1557 = vunpack.c.l.b16 %v1521
  %v1558 = vunpack.c.l.b16 %v1522
  %v1559 = vunpack.c.l.b16 %v1523
  %v1560 = vunpack.c.l.b16 %v1524
  %v1561 = vunpack.c.l.b16 %v1525
  %v1562 = vunpack.c.l.b16 %v1526
  %v1563 = vunpack.c.l.b16 %v1527
  %v1564 = vunpack.c.l.b16 %v1528
  %v1565 = vpack.c.b16 %v1550, %v1549
  %v1566 = vpack.c.b16 %v1552, %v1551
  %v1567 = vpack.c.b16 %v1554, %v1553
  %v1568 = vpack.c.b16 %v1556, %v1555
  %v1569 = vpack.c.b16 %v1558, %v1557
  %v1570 = vpack.c.b16 %v1560, %v1559
  %v1571 = vpack.c.b16 %v1562, %v1561
  %v1572 = vpack.c.b16 %v1564, %v1563
  %1581 = vmatpush.bf16.msra.mxu0 %v1572
  %1582 = vmatpush.bf16.msra.mxu0 %v1571
  %1583 = vmatpush.bf16.msra.mxu0 %v1570
  %1584 = vmatpush.bf16.msra.mxu0 %v1569
  %1585 = vmatpush.bf16.msra.mxu0 %v1568
  %1586 = vmatpush.bf16.msra.mxu0 %v1567
  %1587 = vmatpush.bf16.msra.mxu0 %v1566
  %1588 = vmatpush.bf16.msra.mxu0 %v1565
  %1589 = vmatmul.bf16.gmra.mxu0 %v1512
  %v1590 = vpop.f32.mrf.mxu0
  %v1591 = vadd.f32 %v1531, %v1590
  %v1592 = vpop.f32.mrf.mxu0
  %1593 = vdwg.mxu0
  %1594 = vst [vmem:[%s8] sm:$0xff] %v1591
  // Predicated region
  $region34: #{word_classifier_forward.1} parent=0 // pred_check
    _
  $region35: #{word_classifier_forward.1} parent=0 // pred_check_branch
    %1596 = sbr.rel (0) target = $region37
  $region36: #{word_classifier_forward.1} parent=0 // pred_region
    _
  $region37: #{word_classifier_forward.1} parent=0 // pred_fallthru
    _
  // Predicated region
  $region38: #{word_classifier_forward.1} parent=0 // pred_check
    _
  $region39: #{word_classifier_forward.1} parent=0 // pred_check_branch
    %1598 = sbr.rel (0) target = $region41
  $region40: #{word_classifier_forward.1} parent=0 // pred_region
    _
  $region41: #{word_classifier_forward.1} parent=0 // pred_fallthru
    _

</llo_original>
